<compile_context>
chip_gen: v7x
topology: tpu7x:2x2x1
jax: 0.10.0
libtpu: 0.0.40
codegen_flags: <defaults>
</compile_context>

<pallas_src>
import functools

import jax
import jax.numpy as jnp
from jax.experimental import pallas as pl
from jax.experimental.pallas import tpu as pltpu


def stdgi_kernel(x_ref, adj_ref, permt_ref, wgb_ref, bgb_ref, wbb_ref, bb_ref, out_ref):
    # One batch element per grid step (grid=(B,), "parallel").
    #   x_ref    : (1, N, (S+1)*F)  lane-packed features; lane block t*F:(t+1)*F is time t
    #   adj_ref  : (1, N, N)        dense adjacency of this batch element
    #   permt_ref: (N, S) int32     node permutation (corruption) per step, node-major
    #   wgb_ref  : (S*F, S*H)       block-diagonal GCN linear weight (per-step Wg)
    #   bgb_ref  : (1, S*H)         GCN bias tiled over steps
    #   wbb_ref  : (S*H, S*F)       block-diagonal bilinear weight (per-step Wb)
    #   bb_ref   : (1,) f32 SMEM    bilinear bias
    #   out_ref  : (1, 2, N)        [0]=mean positive scores, [1]=mean negative scores
    N, S = permt_ref.shape
    SF = wgb_ref.shape[0]
    F = SF // S

    xp = x_ref[0]                 # (N, (S+1)*F) f32
    adj = adj_ref[0]              # (N, N)       f32
    x0 = xp[:, :SF]               # features at times 0..S-1, lane-packed
    x1 = xp[:, F:]                # features at times 1..S,   lane-packed

    # --- GCN for all S steps with wide, lane-dense MXU matmuls --------------------
    # (adj @ x_s) @ Wg == adj @ (x_s @ Wg); adj is read/contracted once per batch.
    ax = jnp.dot(adj.astype(jnp.bfloat16), x0.astype(jnp.bfloat16),
                 preferred_element_type=jnp.float32)                   # (N, S*F)
    z = jnp.dot(ax.astype(jnp.bfloat16), wgb_ref[...].astype(jnp.bfloat16),
                preferred_element_type=jnp.float32)                    # (N, S*H)
    embed = jnp.maximum(z + bgb_ref[...], 0.0)                         # ReLU(+bias), f32

    # --- Bilinear discriminator: m_s = embed_s @ Wb, all steps in one wide matmul --
    m = jnp.dot(embed.astype(jnp.bfloat16), wbb_ref[...].astype(jnp.bfloat16),
                preferred_element_type=jnp.float32)                    # (N, S*F)

    # Positive scores: the sums over features AND steps collapse into a single
    # lane-dense elementwise multiply + lane reduction.
    sc_pos = jnp.sum(m * x1, axis=-1, keepdims=True)                   # (N, 1)

    # Negative scores: per-step node corruption applied as a one-hot (N,N) matmul
    # (kept in f32 so the row selection is exact).  S is small & static -> unrolled.
    perm = permt_ref[...]                                              # (N, S) int32
    col = jax.lax.broadcasted_iota(jnp.int32, (N, N), 1)
    sc_neg = jnp.zeros((N, 1), jnp.float32)
    for s in range(S):
        onehot = (perm[:, s:s + 1] == col).astype(jnp.float32)         # (N, N)
        ck = jnp.dot(onehot, x1[:, s * F:(s + 1) * F],
                     preferred_element_type=jnp.float32)               # (N, F) corrupted x_{s+1}
        sc_neg = sc_neg + jnp.sum(m[:, s * F:(s + 1) * F] * ck,
                                  axis=-1, keepdims=True)

    # Mean over steps; bilinear bias folded in ((sum_s sc + S*bb)/S == mean(sc) + bb).
    inv_s = jnp.float32(1.0 / S)
    bb = bb_ref[0]
    scores = jnp.concatenate([sc_pos, sc_neg], axis=1) * inv_s + bb    # (N, 2)
    out_ref[0] = scores.T                                              # lane-dense (2, N) store


@functools.partial(jax.jit, static_argnames=("n_steps",))
def stdgi_forward(inp, adj, perm_idx, wg, bg, wb, bb, *, n_steps=11):
    """inp: (B, T, N, F); adj: (B, N, N); perm_idx: (n_steps, N) int32; bb: (1,)."""
    B, T, N, F = inp.shape
    H = wg.shape[1]
    S = n_steps
    assert T >= S + 1, "need features for times 0..n_steps"
    assert F == H, "Bilinear(n_h, n_h) on raw features requires n_in == n_h"

    # Lane-dense repack (the only wrapper transpose; it buys lane-dense MXU/VPU work):
    # (B, S+1, N, F) -> (B, N, (S+1)*F) with time packed along the lane dim.
    x_pack = jnp.transpose(inp[:, :S + 1].astype(jnp.float32),
                           (0, 2, 1, 3)).reshape(B, N, (S + 1) * F)

    # Block-diagonal per-step weights so one wide matmul applies Wg / Wb to every
    # step at once while the step axis stays packed in the lane dimension.
    eye_s = jnp.eye(S, dtype=jnp.float32)
    wg_big = jnp.einsum('st,fh->sfth', eye_s, wg.astype(jnp.float32)).reshape(S * F, S * H)
    wb_big = jnp.einsum('st,hf->shtf', eye_s, wb.astype(jnp.float32)).reshape(S * H, S * F)
    bg_big = jnp.tile(bg.astype(jnp.float32).reshape(1, H), (1, S))    # (1, S*H)

    perm_t = perm_idx.astype(jnp.int32).T                              # (N, S)
    bb_s = jnp.reshape(bb, (1,)).astype(jnp.float32)

    out = pl.pallas_call(
        stdgi_kernel,
        out_shape=jax.ShapeDtypeStruct((B, 2, N), jnp.float32),
        grid=(B,),
        in_specs=[
            pl.BlockSpec((1, N, (S + 1) * F), lambda b: (b, 0, 0)),    # x (per batch)
            pl.BlockSpec((1, N, N), lambda b: (b, 0, 0)),              # adj (per batch)
            pl.BlockSpec((N, S), lambda b: (0, 0)),                    # permutation idx
            pl.BlockSpec((S * F, S * H), lambda b: (0, 0)),            # block-diag Wg
            pl.BlockSpec((1, S * H), lambda b: (0, 0)),                # tiled GCN bias
            pl.BlockSpec((S * H, S * F), lambda b: (0, 0)),            # block-diag Wb
            pl.BlockSpec(memory_space=pltpu.MemorySpace.SMEM),         # bilinear bias
        ],
        out_specs=pl.BlockSpec((1, 2, N), lambda b: (b, 0, 0)),
        compiler_params=pltpu.CompilerParams(
            dimension_semantics=("parallel",),      # shard batches across TensorCores
            vmem_limit_bytes=32 * 1024 * 1024,      # generous vs the actual footprint
        ),
    )(x_pack, adj.astype(jnp.float32), perm_t, wg_big, bg_big, wb_big, bb_s)

    # (B, 2, N) -> (B, 2N) == concat([sc_pos, sc_neg], node axis) per batch.
    return out.reshape(B, 2 * N)


def stdgi_reference(inp, adj, perm_idx, wg, bg, wb, bb, *, n_steps=11):
    """Pure-JAX (f32) reference mirroring the PyTorch forward."""
    logits = 0.0
    for i in range(n_steps):
        x = inp[:, i]
        xk1 = inp[:, i + 1]
        ck1 = xk1[:, perm_idx[i], :]
        seq_fts = jnp.einsum('bnf,fh->bnh', x, wg)
        embed = jax.nn.relu(jnp.einsum('bnm,bmh->bnh', adj, seq_fts) + bg[0])
        m = jnp.einsum('bnh,hf->bnf', embed, wb)
        sc_pos = jnp.sum(m * xk1, axis=-1) + bb[0]
        sc_neg = jnp.sum(m * ck1, axis=-1) + bb[0]
        logits = logits + jnp.concatenate([sc_pos, sc_neg], axis=1)
    return logits / n_steps


if __name__ == "__main__":
    key = jax.random.PRNGKey(0)

    # Small shapes: B batch, T time steps (>= 12), N graph nodes, F = n_in, H = n_h.
    # Discriminator(n_h) is Bilinear(n_h, n_h, 1), which requires n_in == n_h.
    B, T, N = 2, 12, 16
    n_in = n_h = 8
    n_steps = 11

    k_inp, k_adj, k_wg, k_bg, k_wb, k_bb, k_perm = jax.random.split(key, 7)

    inp = jax.random.normal(k_inp, (B, T, N, n_in), dtype=jnp.float32)

    # Row-normalized random dense adjacency, batched for the bmm in GCN.
    adj_raw = jax.random.uniform(k_adj, (B, N, N), dtype=jnp.float32)
    adj = adj_raw / jnp.sum(adj_raw, axis=-1, keepdims=True)

    # Deterministic synthetic parameter init (no checkpoint loading).
    wg = 0.1 * jax.random.normal(k_wg, (n_in, n_h), dtype=jnp.float32)   # GCN Linear weight (in, out)
    bg = 0.1 * jax.random.normal(k_bg, (1, n_h), dtype=jnp.float32)      # GCN bias
    wb = 0.1 * jax.random.normal(k_wb, (n_h, n_h), dtype=jnp.float32)    # nn.Bilinear(n_h,n_h,1).weight[0]
    bb = 0.1 * jax.random.normal(k_bb, (1,), dtype=jnp.float32)          # nn.Bilinear bias

    # TODO(synk): original forward calls np.random.permutation each step (host RNG);
    # deterministic per-step permutation indices are generated here and passed in.
    perm_idx = jnp.stack(
        [jax.random.permutation(jax.random.fold_in(k_perm, i), N) for i in range(n_steps)],
        axis=0).astype(jnp.int32)                                        # (n_steps, N)

    out = stdgi_forward(inp, adj, perm_idx, wg, bg, wb, bb, n_steps=n_steps)
    out = jax.block_until_ready(out)

    ref = stdgi_reference(inp, adj, perm_idx, wg, bg, wb, bb, n_steps=n_steps)
    assert out.shape == (B, 2 * N), out.shape
    # Kernel uses bf16 MXU matmuls (f32 accumulation) -> loosened tolerance vs f32 ref.
    assert jnp.allclose(out, ref, atol=5e-2, rtol=5e-2), (
        "mismatch vs reference, max abs err = %f" % float(jnp.max(jnp.abs(out - ref))))

    print("KERNEL_OK")
</pallas_src>

<mosaic_0001>
module attributes {stable_mosaic.version = 11 : i64} {
  func.func @stdgi_kernel(%arg0: i32, %arg1: memref<1x16x96xf32, #tpu.memory_space<vmem>>, %arg2: memref<1x16x16xf32, #tpu.memory_space<vmem>>, %arg3: memref<16x11xi32, #tpu.memory_space<vmem>>, %arg4: memref<88x88xf32, #tpu.memory_space<vmem>>, %arg5: memref<1x88xf32, #tpu.memory_space<vmem>>, %arg6: memref<88x88xf32, #tpu.memory_space<vmem>>, %arg7: memref<1xf32, #tpu.memory_space<smem>>, %arg8: memref<1x2x16xf32, #tpu.memory_space<vmem>>) attributes {dimension_semantics = [#tpu.dimension_semantics<parallel>], iteration_bounds = array<i64: 2>, scalar_prefetch = 0 : i64, scratch_operands = 0 : i64, tpu.core_type = #tpu.core_type<tc>, window_params = [{transform_indices = @transform_0, window_bounds = array<i64: 1, 16, 96>}, {transform_indices = @transform_1, window_bounds = array<i64: 1, 16, 16>}, {pipeline_mode = #tpu.pipeline_mode<synchronous>, transform_indices = @transform_2, window_bounds = array<i64: 16, 11>}, {pipeline_mode = #tpu.pipeline_mode<synchronous>, transform_indices = @transform_3, window_bounds = array<i64: 88, 88>}, {pipeline_mode = #tpu.pipeline_mode<synchronous>, transform_indices = @transform_4, window_bounds = array<i64: 1, 88>}, {pipeline_mode = #tpu.pipeline_mode<synchronous>, transform_indices = @transform_5, window_bounds = array<i64: 88, 88>}, {transform_indices = @transform_6, window_bounds = array<i64: 1>}, {transform_indices = @transform_7, window_bounds = array<i64: 1, 2, 16>}]} {
    %c0 = arith.constant 0 : index
    %c0_0 = arith.constant 0 : index
    %c0_1 = arith.constant 0 : index
    %0 = vector.load %arg1[%c0, %c0_0, %c0_1] : memref<1x16x96xf32, #tpu.memory_space<vmem>>, vector<1x16x96xf32>
    %1 = vector.shape_cast %0 : vector<1x16x96xf32> to vector<16x96xf32>
    %c0_2 = arith.constant 0 : index
    %c0_3 = arith.constant 0 : index
    %c0_4 = arith.constant 0 : index
    %2 = vector.load %arg2[%c0_2, %c0_3, %c0_4] : memref<1x16x16xf32, #tpu.memory_space<vmem>>, vector<1x16x16xf32>
    %3 = vector.shape_cast %2 : vector<1x16x16xf32> to vector<16x16xf32>
    %4 = vector.extract_strided_slice %1 {offsets = [0, 0], sizes = [16, 88], strides = [1, 1]} : vector<16x96xf32> to vector<16x88xf32>
    %5 = vector.extract_strided_slice %1 {offsets = [0, 8], sizes = [16, 88], strides = [1, 1]} : vector<16x96xf32> to vector<16x88xf32>
    %6 = arith.truncf %3 : vector<16x16xf32> to vector<16x16xbf16>
    %7 = arith.truncf %4 : vector<16x88xf32> to vector<16x88xbf16>
    %cst = arith.constant dense<0.000000e+00> : vector<16x88xf32>
    %8 = tpu.matmul %6, %7, %cst {dimension_numbers = #tpu.dot_dimension_numbers<[1], [0], [0], [1], [0, 0, 1, 1], [], []>} : vector<16x16xbf16>, vector<16x88xbf16>, vector<16x88xf32> -> vector<16x88xf32>
    %9 = arith.truncf %8 : vector<16x88xf32> to vector<16x88xbf16>
    %c0_5 = arith.constant 0 : index
    %c0_6 = arith.constant 0 : index
    %10 = vector.load %arg4[%c0_5, %c0_6] : memref<88x88xf32, #tpu.memory_space<vmem>>, vector<88x88xf32>
    %11 = arith.truncf %10 : vector<88x88xf32> to vector<88x88xbf16>
    %cst_7 = arith.constant dense<0.000000e+00> : vector<16x88xf32>
    %12 = tpu.matmul %9, %11, %cst_7 {dimension_numbers = #tpu.dot_dimension_numbers<[1], [0], [0], [1], [0, 0, 1, 1], [], []>} : vector<16x88xbf16>, vector<88x88xbf16>, vector<16x88xf32> -> vector<16x88xf32>
    %c0_8 = arith.constant 0 : index
    %c0_9 = arith.constant 0 : index
    %13 = vector.load %arg5[%c0_8, %c0_9] : memref<1x88xf32, #tpu.memory_space<vmem>>, vector<1x88xf32>
    %14 = vector.broadcast %13 : vector<1x88xf32> to vector<16x88xf32>
    %15 = arith.addf %12, %14 : vector<16x88xf32>
    %cst_10 = arith.constant 0.000000e+00 : f32
    %16 = vector.broadcast %cst_10 : f32 to vector<16x88xf32>
    %17 = arith.maximumf %15, %16 : vector<16x88xf32>
    %18 = arith.truncf %17 : vector<16x88xf32> to vector<16x88xbf16>
    %c0_11 = arith.constant 0 : index
    %c0_12 = arith.constant 0 : index
    %19 = vector.load %arg6[%c0_11, %c0_12] : memref<88x88xf32, #tpu.memory_space<vmem>>, vector<88x88xf32>
    %20 = arith.truncf %19 : vector<88x88xf32> to vector<88x88xbf16>
    %cst_13 = arith.constant dense<0.000000e+00> : vector<16x88xf32>
    %21 = tpu.matmul %18, %20, %cst_13 {dimension_numbers = #tpu.dot_dimension_numbers<[1], [0], [0], [1], [0, 0, 1, 1], [], []>} : vector<16x88xbf16>, vector<88x88xbf16>, vector<16x88xf32> -> vector<16x88xf32>
    %22 = arith.mulf %21, %5 : vector<16x88xf32>
    %cst_14 = arith.constant dense<0.000000e+00> : vector<16xf32>
    %23 = vector.multi_reduction <add>, %22, %cst_14 [1] : vector<16x88xf32> to vector<16xf32>
    %24 = vector.shape_cast %23 : vector<16xf32> to vector<16x1xf32>
    %c0_15 = arith.constant 0 : index
    %c0_16 = arith.constant 0 : index
    %25 = vector.load %arg3[%c0_15, %c0_16] : memref<16x11xi32, #tpu.memory_space<vmem>>, vector<16x11xi32>
    %26 = tpu.iota {dimensions = array<i32: 1>} : vector<16x16xi32>
    %cst_17 = arith.constant 0.000000e+00 : f32
    %27 = vector.broadcast %cst_17 : f32 to vector<16x1xf32>
    %28 = vector.extract_strided_slice %25 {offsets = [0, 0], sizes = [16, 1], strides = [1, 1]} : vector<16x11xi32> to vector<16x1xi32>
    %29 = vector.broadcast %28 : vector<16x1xi32> to vector<16x16xi32>
    %30 = arith.cmpi eq, %29, %26 : vector<16x16xi32>
    %31 = arith.extui %30 : vector<16x16xi1> to vector<16x16xi32>
    %32 = arith.sitofp %31 : vector<16x16xi32> to vector<16x16xf32>
    %33 = vector.extract_strided_slice %5 {offsets = [0, 0], sizes = [16, 8], strides = [1, 1]} : vector<16x88xf32> to vector<16x8xf32>
    %cst_18 = arith.constant dense<0.000000e+00> : vector<16x8xf32>
    %34 = tpu.matmul %32, %33, %cst_18 {dimension_numbers = #tpu.dot_dimension_numbers<[1], [0], [0], [1], [0, 0, 1, 1], [], []>} : vector<16x16xf32>, vector<16x8xf32>, vector<16x8xf32> -> vector<16x8xf32>
    %35 = vector.extract_strided_slice %21 {offsets = [0, 0], sizes = [16, 8], strides = [1, 1]} : vector<16x88xf32> to vector<16x8xf32>
    %36 = arith.mulf %35, %34 : vector<16x8xf32>
    %cst_19 = arith.constant dense<0.000000e+00> : vector<16xf32>
    %37 = vector.multi_reduction <add>, %36, %cst_19 [1] : vector<16x8xf32> to vector<16xf32>
    %38 = vector.shape_cast %37 : vector<16xf32> to vector<16x1xf32>
    %39 = arith.addf %27, %38 : vector<16x1xf32>
    %40 = vector.extract_strided_slice %25 {offsets = [0, 1], sizes = [16, 1], strides = [1, 1]} : vector<16x11xi32> to vector<16x1xi32>
    %41 = vector.broadcast %40 : vector<16x1xi32> to vector<16x16xi32>
    %42 = arith.cmpi eq, %41, %26 : vector<16x16xi32>
    %43 = arith.extui %42 : vector<16x16xi1> to vector<16x16xi32>
    %44 = arith.sitofp %43 : vector<16x16xi32> to vector<16x16xf32>
    %45 = vector.extract_strided_slice %5 {offsets = [0, 8], sizes = [16, 8], strides = [1, 1]} : vector<16x88xf32> to vector<16x8xf32>
    %cst_20 = arith.constant dense<0.000000e+00> : vector<16x8xf32>
    %46 = tpu.matmul %44, %45, %cst_20 {dimension_numbers = #tpu.dot_dimension_numbers<[1], [0], [0], [1], [0, 0, 1, 1], [], []>} : vector<16x16xf32>, vector<16x8xf32>, vector<16x8xf32> -> vector<16x8xf32>
    %47 = vector.extract_strided_slice %21 {offsets = [0, 8], sizes = [16, 8], strides = [1, 1]} : vector<16x88xf32> to vector<16x8xf32>
    %48 = arith.mulf %47, %46 : vector<16x8xf32>
    %cst_21 = arith.constant dense<0.000000e+00> : vector<16xf32>
    %49 = vector.multi_reduction <add>, %48, %cst_21 [1] : vector<16x8xf32> to vector<16xf32>
    %50 = vector.shape_cast %49 : vector<16xf32> to vector<16x1xf32>
    %51 = arith.addf %39, %50 : vector<16x1xf32>
    %52 = vector.extract_strided_slice %25 {offsets = [0, 2], sizes = [16, 1], strides = [1, 1]} : vector<16x11xi32> to vector<16x1xi32>
    %53 = vector.broadcast %52 : vector<16x1xi32> to vector<16x16xi32>
    %54 = arith.cmpi eq, %53, %26 : vector<16x16xi32>
    %55 = arith.extui %54 : vector<16x16xi1> to vector<16x16xi32>
    %56 = arith.sitofp %55 : vector<16x16xi32> to vector<16x16xf32>
    %57 = vector.extract_strided_slice %5 {offsets = [0, 16], sizes = [16, 8], strides = [1, 1]} : vector<16x88xf32> to vector<16x8xf32>
    %cst_22 = arith.constant dense<0.000000e+00> : vector<16x8xf32>
    %58 = tpu.matmul %56, %57, %cst_22 {dimension_numbers = #tpu.dot_dimension_numbers<[1], [0], [0], [1], [0, 0, 1, 1], [], []>} : vector<16x16xf32>, vector<16x8xf32>, vector<16x8xf32> -> vector<16x8xf32>
    %59 = vector.extract_strided_slice %21 {offsets = [0, 16], sizes = [16, 8], strides = [1, 1]} : vector<16x88xf32> to vector<16x8xf32>
    %60 = arith.mulf %59, %58 : vector<16x8xf32>
    %cst_23 = arith.constant dense<0.000000e+00> : vector<16xf32>
    %61 = vector.multi_reduction <add>, %60, %cst_23 [1] : vector<16x8xf32> to vector<16xf32>
    %62 = vector.shape_cast %61 : vector<16xf32> to vector<16x1xf32>
    %63 = arith.addf %51, %62 : vector<16x1xf32>
    %64 = vector.extract_strided_slice %25 {offsets = [0, 3], sizes = [16, 1], strides = [1, 1]} : vector<16x11xi32> to vector<16x1xi32>
    %65 = vector.broadcast %64 : vector<16x1xi32> to vector<16x16xi32>
    %66 = arith.cmpi eq, %65, %26 : vector<16x16xi32>
    %67 = arith.extui %66 : vector<16x16xi1> to vector<16x16xi32>
    %68 = arith.sitofp %67 : vector<16x16xi32> to vector<16x16xf32>
    %69 = vector.extract_strided_slice %5 {offsets = [0, 24], sizes = [16, 8], strides = [1, 1]} : vector<16x88xf32> to vector<16x8xf32>
    %cst_24 = arith.constant dense<0.000000e+00> : vector<16x8xf32>
    %70 = tpu.matmul %68, %69, %cst_24 {dimension_numbers = #tpu.dot_dimension_numbers<[1], [0], [0], [1], [0, 0, 1, 1], [], []>} : vector<16x16xf32>, vector<16x8xf32>, vector<16x8xf32> -> vector<16x8xf32>
    %71 = vector.extract_strided_slice %21 {offsets = [0, 24], sizes = [16, 8], strides = [1, 1]} : vector<16x88xf32> to vector<16x8xf32>
    %72 = arith.mulf %71, %70 : vector<16x8xf32>
    %cst_25 = arith.constant dense<0.000000e+00> : vector<16xf32>
    %73 = vector.multi_reduction <add>, %72, %cst_25 [1] : vector<16x8xf32> to vector<16xf32>
    %74 = vector.shape_cast %73 : vector<16xf32> to vector<16x1xf32>
    %75 = arith.addf %63, %74 : vector<16x1xf32>
    %76 = vector.extract_strided_slice %25 {offsets = [0, 4], sizes = [16, 1], strides = [1, 1]} : vector<16x11xi32> to vector<16x1xi32>
    %77 = vector.broadcast %76 : vector<16x1xi32> to vector<16x16xi32>
    %78 = arith.cmpi eq, %77, %26 : vector<16x16xi32>
    %79 = arith.extui %78 : vector<16x16xi1> to vector<16x16xi32>
    %80 = arith.sitofp %79 : vector<16x16xi32> to vector<16x16xf32>
    %81 = vector.extract_strided_slice %5 {offsets = [0, 32], sizes = [16, 8], strides = [1, 1]} : vector<16x88xf32> to vector<16x8xf32>
    %cst_26 = arith.constant dense<0.000000e+00> : vector<16x8xf32>
    %82 = tpu.matmul %80, %81, %cst_26 {dimension_numbers = #tpu.dot_dimension_numbers<[1], [0], [0], [1], [0, 0, 1, 1], [], []>} : vector<16x16xf32>, vector<16x8xf32>, vector<16x8xf32> -> vector<16x8xf32>
    %83 = vector.extract_strided_slice %21 {offsets = [0, 32], sizes = [16, 8], strides = [1, 1]} : vector<16x88xf32> to vector<16x8xf32>
    %84 = arith.mulf %83, %82 : vector<16x8xf32>
    %cst_27 = arith.constant dense<0.000000e+00> : vector<16xf32>
    %85 = vector.multi_reduction <add>, %84, %cst_27 [1] : vector<16x8xf32> to vector<16xf32>
    %86 = vector.shape_cast %85 : vector<16xf32> to vector<16x1xf32>
    %87 = arith.addf %75, %86 : vector<16x1xf32>
    %88 = vector.extract_strided_slice %25 {offsets = [0, 5], sizes = [16, 1], strides = [1, 1]} : vector<16x11xi32> to vector<16x1xi32>
    %89 = vector.broadcast %88 : vector<16x1xi32> to vector<16x16xi32>
    %90 = arith.cmpi eq, %89, %26 : vector<16x16xi32>
    %91 = arith.extui %90 : vector<16x16xi1> to vector<16x16xi32>
    %92 = arith.sitofp %91 : vector<16x16xi32> to vector<16x16xf32>
    %93 = vector.extract_strided_slice %5 {offsets = [0, 40], sizes = [16, 8], strides = [1, 1]} : vector<16x88xf32> to vector<16x8xf32>
    %cst_28 = arith.constant dense<0.000000e+00> : vector<16x8xf32>
    %94 = tpu.matmul %92, %93, %cst_28 {dimension_numbers = #tpu.dot_dimension_numbers<[1], [0], [0], [1], [0, 0, 1, 1], [], []>} : vector<16x16xf32>, vector<16x8xf32>, vector<16x8xf32> -> vector<16x8xf32>
    %95 = vector.extract_strided_slice %21 {offsets = [0, 40], sizes = [16, 8], strides = [1, 1]} : vector<16x88xf32> to vector<16x8xf32>
    %96 = arith.mulf %95, %94 : vector<16x8xf32>
    %cst_29 = arith.constant dense<0.000000e+00> : vector<16xf32>
    %97 = vector.multi_reduction <add>, %96, %cst_29 [1] : vector<16x8xf32> to vector<16xf32>
    %98 = vector.shape_cast %97 : vector<16xf32> to vector<16x1xf32>
    %99 = arith.addf %87, %98 : vector<16x1xf32>
    %100 = vector.extract_strided_slice %25 {offsets = [0, 6], sizes = [16, 1], strides = [1, 1]} : vector<16x11xi32> to vector<16x1xi32>
    %101 = vector.broadcast %100 : vector<16x1xi32> to vector<16x16xi32>
    %102 = arith.cmpi eq, %101, %26 : vector<16x16xi32>
    %103 = arith.extui %102 : vector<16x16xi1> to vector<16x16xi32>
    %104 = arith.sitofp %103 : vector<16x16xi32> to vector<16x16xf32>
    %105 = vector.extract_strided_slice %5 {offsets = [0, 48], sizes = [16, 8], strides = [1, 1]} : vector<16x88xf32> to vector<16x8xf32>
    %cst_30 = arith.constant dense<0.000000e+00> : vector<16x8xf32>
    %106 = tpu.matmul %104, %105, %cst_30 {dimension_numbers = #tpu.dot_dimension_numbers<[1], [0], [0], [1], [0, 0, 1, 1], [], []>} : vector<16x16xf32>, vector<16x8xf32>, vector<16x8xf32> -> vector<16x8xf32>
    %107 = vector.extract_strided_slice %21 {offsets = [0, 48], sizes = [16, 8], strides = [1, 1]} : vector<16x88xf32> to vector<16x8xf32>
    %108 = arith.mulf %107, %106 : vector<16x8xf32>
    %cst_31 = arith.constant dense<0.000000e+00> : vector<16xf32>
    %109 = vector.multi_reduction <add>, %108, %cst_31 [1] : vector<16x8xf32> to vector<16xf32>
    %110 = vector.shape_cast %109 : vector<16xf32> to vector<16x1xf32>
    %111 = arith.addf %99, %110 : vector<16x1xf32>
    %112 = vector.extract_strided_slice %25 {offsets = [0, 7], sizes = [16, 1], strides = [1, 1]} : vector<16x11xi32> to vector<16x1xi32>
    %113 = vector.broadcast %112 : vector<16x1xi32> to vector<16x16xi32>
    %114 = arith.cmpi eq, %113, %26 : vector<16x16xi32>
    %115 = arith.extui %114 : vector<16x16xi1> to vector<16x16xi32>
    %116 = arith.sitofp %115 : vector<16x16xi32> to vector<16x16xf32>
    %117 = vector.extract_strided_slice %5 {offsets = [0, 56], sizes = [16, 8], strides = [1, 1]} : vector<16x88xf32> to vector<16x8xf32>
    %cst_32 = arith.constant dense<0.000000e+00> : vector<16x8xf32>
    %118 = tpu.matmul %116, %117, %cst_32 {dimension_numbers = #tpu.dot_dimension_numbers<[1], [0], [0], [1], [0, 0, 1, 1], [], []>} : vector<16x16xf32>, vector<16x8xf32>, vector<16x8xf32> -> vector<16x8xf32>
    %119 = vector.extract_strided_slice %21 {offsets = [0, 56], sizes = [16, 8], strides = [1, 1]} : vector<16x88xf32> to vector<16x8xf32>
    %120 = arith.mulf %119, %118 : vector<16x8xf32>
    %cst_33 = arith.constant dense<0.000000e+00> : vector<16xf32>
    %121 = vector.multi_reduction <add>, %120, %cst_33 [1] : vector<16x8xf32> to vector<16xf32>
    %122 = vector.shape_cast %121 : vector<16xf32> to vector<16x1xf32>
    %123 = arith.addf %111, %122 : vector<16x1xf32>
    %124 = vector.extract_strided_slice %25 {offsets = [0, 8], sizes = [16, 1], strides = [1, 1]} : vector<16x11xi32> to vector<16x1xi32>
    %125 = vector.broadcast %124 : vector<16x1xi32> to vector<16x16xi32>
    %126 = arith.cmpi eq, %125, %26 : vector<16x16xi32>
    %127 = arith.extui %126 : vector<16x16xi1> to vector<16x16xi32>
    %128 = arith.sitofp %127 : vector<16x16xi32> to vector<16x16xf32>
    %129 = vector.extract_strided_slice %5 {offsets = [0, 64], sizes = [16, 8], strides = [1, 1]} : vector<16x88xf32> to vector<16x8xf32>
    %cst_34 = arith.constant dense<0.000000e+00> : vector<16x8xf32>
    %130 = tpu.matmul %128, %129, %cst_34 {dimension_numbers = #tpu.dot_dimension_numbers<[1], [0], [0], [1], [0, 0, 1, 1], [], []>} : vector<16x16xf32>, vector<16x8xf32>, vector<16x8xf32> -> vector<16x8xf32>
    %131 = vector.extract_strided_slice %21 {offsets = [0, 64], sizes = [16, 8], strides = [1, 1]} : vector<16x88xf32> to vector<16x8xf32>
    %132 = arith.mulf %131, %130 : vector<16x8xf32>
    %cst_35 = arith.constant dense<0.000000e+00> : vector<16xf32>
    %133 = vector.multi_reduction <add>, %132, %cst_35 [1] : vector<16x8xf32> to vector<16xf32>
    %134 = vector.shape_cast %133 : vector<16xf32> to vector<16x1xf32>
    %135 = arith.addf %123, %134 : vector<16x1xf32>
    %136 = vector.extract_strided_slice %25 {offsets = [0, 9], sizes = [16, 1], strides = [1, 1]} : vector<16x11xi32> to vector<16x1xi32>
    %137 = vector.broadcast %136 : vector<16x1xi32> to vector<16x16xi32>
    %138 = arith.cmpi eq, %137, %26 : vector<16x16xi32>
    %139 = arith.extui %138 : vector<16x16xi1> to vector<16x16xi32>
    %140 = arith.sitofp %139 : vector<16x16xi32> to vector<16x16xf32>
    %141 = vector.extract_strided_slice %5 {offsets = [0, 72], sizes = [16, 8], strides = [1, 1]} : vector<16x88xf32> to vector<16x8xf32>
    %cst_36 = arith.constant dense<0.000000e+00> : vector<16x8xf32>
    %142 = tpu.matmul %140, %141, %cst_36 {dimension_numbers = #tpu.dot_dimension_numbers<[1], [0], [0], [1], [0, 0, 1, 1], [], []>} : vector<16x16xf32>, vector<16x8xf32>, vector<16x8xf32> -> vector<16x8xf32>
    %143 = vector.extract_strided_slice %21 {offsets = [0, 72], sizes = [16, 8], strides = [1, 1]} : vector<16x88xf32> to vector<16x8xf32>
    %144 = arith.mulf %143, %142 : vector<16x8xf32>
    %cst_37 = arith.constant dense<0.000000e+00> : vector<16xf32>
    %145 = vector.multi_reduction <add>, %144, %cst_37 [1] : vector<16x8xf32> to vector<16xf32>
    %146 = vector.shape_cast %145 : vector<16xf32> to vector<16x1xf32>
    %147 = arith.addf %135, %146 : vector<16x1xf32>
    %148 = vector.extract_strided_slice %25 {offsets = [0, 10], sizes = [16, 1], strides = [1, 1]} : vector<16x11xi32> to vector<16x1xi32>
    %149 = vector.broadcast %148 : vector<16x1xi32> to vector<16x16xi32>
    %150 = arith.cmpi eq, %149, %26 : vector<16x16xi32>
    %151 = arith.extui %150 : vector<16x16xi1> to vector<16x16xi32>
    %152 = arith.sitofp %151 : vector<16x16xi32> to vector<16x16xf32>
    %153 = vector.extract_strided_slice %5 {offsets = [0, 80], sizes = [16, 8], strides = [1, 1]} : vector<16x88xf32> to vector<16x8xf32>
    %cst_38 = arith.constant dense<0.000000e+00> : vector<16x8xf32>
    %154 = tpu.matmul %152, %153, %cst_38 {dimension_numbers = #tpu.dot_dimension_numbers<[1], [0], [0], [1], [0, 0, 1, 1], [], []>} : vector<16x16xf32>, vector<16x8xf32>, vector<16x8xf32> -> vector<16x8xf32>
    %155 = vector.extract_strided_slice %21 {offsets = [0, 80], sizes = [16, 8], strides = [1, 1]} : vector<16x88xf32> to vector<16x8xf32>
    %156 = arith.mulf %155, %154 : vector<16x8xf32>
    %cst_39 = arith.constant dense<0.000000e+00> : vector<16xf32>
    %157 = vector.multi_reduction <add>, %156, %cst_39 [1] : vector<16x8xf32> to vector<16xf32>
    %158 = vector.shape_cast %157 : vector<16xf32> to vector<16x1xf32>
    %159 = arith.addf %147, %158 : vector<16x1xf32>
    %c0_40 = arith.constant 0 : index
    %160 = memref.load %arg7[%c0_40] : memref<1xf32, #tpu.memory_space<smem>>
    %161 = tpu.concatenate %24, %159 in 1 : vector<16x1xf32>, vector<16x1xf32> -> vector<16x2xf32>
    %cst_41 = arith.constant 0.0909090936 : f32
    %162 = vector.broadcast %cst_41 : f32 to vector<16x2xf32>
    %163 = arith.mulf %161, %162 : vector<16x2xf32>
    %164 = vector.broadcast %160 : f32 to vector<16x2xf32>
    %165 = arith.addf %163, %164 : vector<16x2xf32>
    %166 = tpu.transpose %165, [1, 0] : vector<16x2xf32> -> vector<2x16xf32>
    %c0_42 = arith.constant 0 : index
    %c0_43 = arith.constant 0 : index
    %c0_44 = arith.constant 0 : index
    %167 = vector.load %arg8[%c0_42, %c0_43, %c0_44] : memref<1x2x16xf32, #tpu.memory_space<vmem>>, vector<1x2x16xf32>
    %168 = vector.shape_cast %167 : vector<1x2x16xf32> to vector<2x16xf32>
    %169 = vector.shape_cast %166 : vector<2x16xf32> to vector<1x2x16xf32>
    tpu.vector_store %arg8[%c0_42, %c0_43, %c0_44], %169 {strides = array<i32>} : memref<1x2x16xf32, #tpu.memory_space<vmem>>, vector<1x2x16xf32>,
    return
  }
  func.func @transform_0(%arg0: i32) -> (i32, i32, i32) {
    %c0_i32 = arith.constant 0 : i32
    %c0_i32_0 = arith.constant 0 : i32
    %c0_i32_1 = arith.constant 0 : i32
    return %arg0, %c0_i32, %c0_i32_0 : i32, i32, i32
  }
  func.func @transform_1(%arg0: i32) -> (i32, i32, i32) {
    %c0_i32 = arith.constant 0 : i32
    %c0_i32_0 = arith.constant 0 : i32
    %c0_i32_1 = arith.constant 0 : i32
    return %arg0, %c0_i32, %c0_i32_0 : i32, i32, i32
  }
  func.func @transform_2(%arg0: i32) -> (i32, i32) {
    %c0_i32 = arith.constant 0 : i32
    %c0_i32_0 = arith.constant 0 : i32
    %c0_i32_1 = arith.constant 0 : i32
    return %c0_i32, %c0_i32_0 : i32, i32
  }
  func.func @transform_3(%arg0: i32) -> (i32, i32) {
    %c0_i32 = arith.constant 0 : i32
    %c0_i32_0 = arith.constant 0 : i32
    %c0_i32_1 = arith.constant 0 : i32
    return %c0_i32, %c0_i32_0 : i32, i32
  }
  func.func @transform_4(%arg0: i32) -> (i32, i32) {
    %c0_i32 = arith.constant 0 : i32
    %c0_i32_0 = arith.constant 0 : i32
    %c0_i32_1 = arith.constant 0 : i32
    return %c0_i32, %c0_i32_0 : i32, i32
  }
  func.func @transform_5(%arg0: i32) -> (i32, i32) {
    %c0_i32 = arith.constant 0 : i32
    %c0_i32_0 = arith.constant 0 : i32
    %c0_i32_1 = arith.constant 0 : i32
    return %c0_i32, %c0_i32_0 : i32, i32
  }
  func.func @transform_6(%arg0: i32) -> i32 {
    %c0_i32 = arith.constant 0 : i32
    %c0_i32_0 = arith.constant 0 : i32
    return %c0_i32 : i32
  }
  func.func @transform_7(%arg0: i32) -> (i32, i32, i32) {
    %c0_i32 = arith.constant 0 : i32
    %c0_i32_0 = arith.constant 0 : i32
    %c0_i32_1 = arith.constant 0 : i32
    return %arg0, %c0_i32, %c0_i32_0 : i32, i32, i32
  }
}

</mosaic_0001>

<llo_original>
// kernel: stdgi_forward.1
$region0: #{stdgi_forward.1}
  #allocation0 [shape = 'u32[]', space=smem, size = 0x4, offset = 0x4, fixed_abs, tag = 'smem constant byte address 0x4 - core index']
  #allocation1 [shape = 'u32[144,128]{1,0:T(1,128)}', space=vmem, size = 0x12000, scoped, tag = 'internal scratch']
  #allocation2 [shape = 'f32[1]{0:T(128)S(6)}', space=smem, size = 0x200, scoped, tag = 'scoped memory for stdgi_forward.1']
  %s0 = inlined_call_operand.vmem [shape: f32[2,16,96], index: 0, kind: input, shape index: {}]
  %s1 = inlined_call_operand.vmem [shape: f32[2,16,16], index: 1, kind: input, shape index: {}]
  %s2 = inlined_call_operand.vmem [shape: s32[16,11], index: 2, kind: input, shape index: {}]
  %s3 = inlined_call_operand.vmem [shape: f32[88,88], index: 3, kind: input, shape index: {}]
  %s4 = inlined_call_operand.vmem [shape: f32[1,88], index: 4, kind: input, shape index: {}]
  %s5 = inlined_call_operand.vmem [shape: f32[88,88], index: 5, kind: input, shape index: {}]
  %s6 = inlined_call_operand.<no memory space> [shape: f32[1], index: 6, kind: input, shape index: {}]
  %s7 = inlined_call_operand.vmem [shape: f32[2,2,16], index: 7, kind: output, shape index: {}]
  %s8 = sld [smem:[#allocation0]]
  $region61: #{stdgi_forward.1} parent=0
    _
  %s10 = ssub.s32 1, %s8
  %s11 = scalar_select 0, %s10, %s8
  %12 = sst [smem:[#allocation2]] %s6
  loop: start=0, step=1, limit=4
  $region2: #{stdgi_forward.1} parent=0 // loop_pre_header
    _
  $region3: #{stdgi_forward.1} parent=0 // loop_header
    %s14 = sphi 0, %s18
    %p15 = scmp.ge.s32.totalorder %s14, 4
    %s24 = sphi 0, %s26
    %s27 = sphi 0, %s24
    %s28 = sphi 0, %s27
    %s44 = sphi 0, %s28
    %s50 = sphi 0, %s52
    %s53 = sphi 0, %s50
    %s54 = sphi 0, %s53
    %s70 = sphi 0, %s54
    %s74 = sphi 0, %s74
    %s76 = sphi 0, %s74
    %s77 = sphi 0, %s76
    %s91 = sphi 0, %s77
    %s95 = sphi 0, %s95
    %s97 = sphi 0, %s95
    %s98 = sphi 0, %s97
    %s112 = sphi 0, %s98
    %s116 = sphi 0, %s116
    %s118 = sphi 0, %s116
    %s119 = sphi 0, %s118
    %s133 = sphi 0, %s119
    %s137 = sphi 0, %s137
    %s139 = sphi 0, %s137
    %s140 = sphi 0, %s139
    %s154 = sphi 0, %s140
    %s158 = sphi 0, %s158
    %s160 = sphi 0, %s158
    %s161 = sphi 0, %s160
    %s175 = sphi 0, %s161
    %s181 = sphi 0, %s183
    %s184 = sphi 0, %s181
    %s185 = sphi 0, %s184
    %s201 = sphi 0, %s185
  $region4: #{stdgi_forward.1} parent=0 // loop_header_branch
    %17 = sbr.rel (%p15) target = $region8
  $region5: #{stdgi_forward.1} parent=0 // loop_body
    %s19 = ssub.s32 %s14, 1
    %s20 = ssub.s32 %s14, 2
    %s21 = sadd.s32 %s14, 1
    %s22 = ssub.s32 %s14, %s21
    %p23 = scmp.eq.s32.totalorder %s22, 0
    %s25 = sadd.s32 %s24, 1
    %s26 = scalar_select %p23, %s24, %s25
    %p29 = pneg %p23
    %p30 = scmp.eq.s32.totalorder %s14, 1
    %p31 = por %p29, %p30
    %p32 = scmp.ne.s32.totalorder %s24, %s27
    %p33 = scmp.eq.s32.totalorder %s14, 0
    %p34 = por %p32, %p33
    %p35 = scmp.ne.s32.totalorder %s24, %s27
    %p36 = scmp.eq.s32.totalorder %s19, 1
    %p37 = por %p35, %p36
    %p38 = scmp.ne.s32.totalorder %s27, %s28
    %p39 = scmp.eq.s32.totalorder %s19, 0
    %p40 = por %p38, %p39
    %p41 = scmp.ne.s32.totalorder %s27, %s28
    %p42 = scmp.eq.s32.totalorder %s20, 1
    %p43 = por %p41, %p42
    %p45 = scmp.ne.s32.totalorder %s28, %s44
    %p46 = scmp.eq.s32.totalorder %s20, 0
    %p47 = por %p45, %p46
    %s48 = ssub.s32 %s14, %s21
    %p49 = scmp.eq.s32.totalorder %s48, 0
    %s51 = sadd.s32 %s50, 1
    %s52 = scalar_select %p49, %s50, %s51
    %p55 = pneg %p49
    %p56 = scmp.eq.s32.totalorder %s14, 1
    %p57 = por %p55, %p56
    %p58 = scmp.ne.s32.totalorder %s50, %s53
    %p59 = scmp.eq.s32.totalorder %s14, 0
    %p60 = por %p58, %p59
    %p61 = scmp.ne.s32.totalorder %s50, %s53
    %p62 = scmp.eq.s32.totalorder %s19, 1
    %p63 = por %p61, %p62
    %p64 = scmp.ne.s32.totalorder %s53, %s54
    %p65 = scmp.eq.s32.totalorder %s19, 0
    %p66 = por %p64, %p65
    %p67 = scmp.ne.s32.totalorder %s53, %s54
    %p68 = scmp.eq.s32.totalorder %s20, 1
    %p69 = por %p67, %p68
    %p71 = scmp.ne.s32.totalorder %s54, %s70
    %p72 = scmp.eq.s32.totalorder %s20, 0
    %p73 = por %p71, %p72
    %s75 = sadd.s32 %s74, 1
    %p78 = scmp.eq.s32.totalorder %s14, 1
    %p79 = scmp.ne.s32.totalorder %s74, %s76
    %p80 = scmp.eq.s32.totalorder %s14, 0
    %p81 = por %p79, %p80
    %p82 = scmp.ne.s32.totalorder %s74, %s76
    %p83 = scmp.eq.s32.totalorder %s19, 1
    %p84 = por %p82, %p83
    %p85 = scmp.ne.s32.totalorder %s76, %s77
    %p86 = scmp.eq.s32.totalorder %s19, 0
    %p87 = por %p85, %p86
    %p88 = scmp.ne.s32.totalorder %s76, %s77
    %p89 = scmp.eq.s32.totalorder %s20, 1
    %p90 = por %p88, %p89
    %p92 = scmp.ne.s32.totalorder %s77, %s91
    %p93 = scmp.eq.s32.totalorder %s20, 0
    %p94 = por %p92, %p93
    %s96 = sadd.s32 %s95, 1
    %p99 = scmp.eq.s32.totalorder %s14, 1
    %p100 = scmp.ne.s32.totalorder %s95, %s97
    %p101 = scmp.eq.s32.totalorder %s14, 0
    %p102 = por %p100, %p101
    %p103 = scmp.ne.s32.totalorder %s95, %s97
    %p104 = scmp.eq.s32.totalorder %s19, 1
    %p105 = por %p103, %p104
    %p106 = scmp.ne.s32.totalorder %s97, %s98
    %p107 = scmp.eq.s32.totalorder %s19, 0
    %p108 = por %p106, %p107
    %p109 = scmp.ne.s32.totalorder %s97, %s98
    %p110 = scmp.eq.s32.totalorder %s20, 1
    %p111 = por %p109, %p110
    %p113 = scmp.ne.s32.totalorder %s98, %s112
    %p114 = scmp.eq.s32.totalorder %s20, 0
    %p115 = por %p113, %p114
    %s117 = sadd.s32 %s116, 1
    %p120 = scmp.eq.s32.totalorder %s14, 1
    %p121 = scmp.ne.s32.totalorder %s116, %s118
    %p122 = scmp.eq.s32.totalorder %s14, 0
    %p123 = por %p121, %p122
    %p124 = scmp.ne.s32.totalorder %s116, %s118
    %p125 = scmp.eq.s32.totalorder %s19, 1
    %p126 = por %p124, %p125
    %p127 = scmp.ne.s32.totalorder %s118, %s119
    %p128 = scmp.eq.s32.totalorder %s19, 0
    %p129 = por %p127, %p128
    %p130 = scmp.ne.s32.totalorder %s118, %s119
    %p131 = scmp.eq.s32.totalorder %s20, 1
    %p132 = por %p130, %p131
    %p134 = scmp.ne.s32.totalorder %s119, %s133
    %p135 = scmp.eq.s32.totalorder %s20, 0
    %p136 = por %p134, %p135
    %s138 = sadd.s32 %s137, 1
    %p141 = scmp.eq.s32.totalorder %s14, 1
    %p142 = scmp.ne.s32.totalorder %s137, %s139
    %p143 = scmp.eq.s32.totalorder %s14, 0
    %p144 = por %p142, %p143
    %p145 = scmp.ne.s32.totalorder %s137, %s139
    %p146 = scmp.eq.s32.totalorder %s19, 1
    %p147 = por %p145, %p146
    %p148 = scmp.ne.s32.totalorder %s139, %s140
    %p149 = scmp.eq.s32.totalorder %s19, 0
    %p150 = por %p148, %p149
    %p151 = scmp.ne.s32.totalorder %s139, %s140
    %p152 = scmp.eq.s32.totalorder %s20, 1
    %p153 = por %p151, %p152
    %p155 = scmp.ne.s32.totalorder %s140, %s154
    %p156 = scmp.eq.s32.totalorder %s20, 0
    %p157 = por %p155, %p156
    %s159 = sadd.s32 %s158, 1
    %p162 = scmp.eq.s32.totalorder %s14, 1
    %p163 = scmp.ne.s32.totalorder %s158, %s160
    %p164 = scmp.eq.s32.totalorder %s14, 0
    %p165 = por %p163, %p164
    %p166 = scmp.ne.s32.totalorder %s158, %s160
    %p167 = scmp.eq.s32.totalorder %s19, 1
    %p168 = por %p166, %p167
    %p169 = scmp.ne.s32.totalorder %s160, %s161
    %p170 = scmp.eq.s32.totalorder %s19, 0
    %p171 = por %p169, %p170
    %p172 = scmp.ne.s32.totalorder %s160, %s161
    %p173 = scmp.eq.s32.totalorder %s20, 1
    %p174 = por %p172, %p173
    %p176 = scmp.ne.s32.totalorder %s161, %s175
    %p177 = scmp.eq.s32.totalorder %s20, 0
    %p178 = por %p176, %p177
    %s179 = ssub.s32 %s14, %s21
    %p180 = scmp.eq.s32.totalorder %s179, 0
    %s182 = sadd.s32 %s181, 1
    %s183 = scalar_select %p180, %s181, %s182
    %p186 = pneg %p180
    %p187 = scmp.eq.s32.totalorder %s14, 1
    %p188 = por %p186, %p187
    %p189 = scmp.ne.s32.totalorder %s181, %s184
    %p190 = scmp.eq.s32.totalorder %s14, 0
    %p191 = por %p189, %p190
    %p192 = scmp.ne.s32.totalorder %s181, %s184
    %p193 = scmp.eq.s32.totalorder %s19, 1
    %p194 = por %p192, %p193
    %p195 = scmp.ne.s32.totalorder %s184, %s185
    %p196 = scmp.eq.s32.totalorder %s19, 0
    %p197 = por %p195, %p196
    %p198 = scmp.ne.s32.totalorder %s184, %s185
    %p199 = scmp.eq.s32.totalorder %s20, 1
    %p200 = por %p198, %p199
    %p202 = scmp.ne.s32.totalorder %s185, %s201
    %p203 = scmp.eq.s32.totalorder %s20, 0
    %p204 = por %p202, %p203
    %p205 = scmp.le.s32.totalorder 1, %s14
    %p206 = scmp.lt.s32.totalorder %s14, 3
    %p207 = pnand %p205, %p206
    %p208 = pneg %p207
    // Predicated region
    $region9: #{stdgi_forward.1} parent=5 // pred_check
      _
    $region10: #{stdgi_forward.1} parent=5 // pred_check_branch
      %210 = sbr.rel (%p207) target = $region12
    $region11: #{stdgi_forward.1} parent=5 // pred_region
      %s211 = ssub.s32 %s14, 1
      // Predicated region
      $region13: #{stdgi_forward.1} parent=11 // pred_check
        %p212 = pneg %p87
      $region14: #{stdgi_forward.1} parent=11 // pred_check_branch
        %214 = sbr.rel (%p212) target = $region16
      $region15: #{stdgi_forward.1} parent=11 // pred_region
        _
      $region16: #{stdgi_forward.1} parent=11 // pred_fallthru
        _
      // Predicated region
      $region17: #{stdgi_forward.1} parent=11 // pred_check
        %p215 = pneg %p108
      $region18: #{stdgi_forward.1} parent=11 // pred_check_branch
        %217 = sbr.rel (%p215) target = $region20
      $region19: #{stdgi_forward.1} parent=11 // pred_region
        _
      $region20: #{stdgi_forward.1} parent=11 // pred_fallthru
        _
      // Predicated region
      $region21: #{stdgi_forward.1} parent=11 // pred_check
        %p218 = pneg %p129
      $region22: #{stdgi_forward.1} parent=11 // pred_check_branch
        %220 = sbr.rel (%p218) target = $region24
      $region23: #{stdgi_forward.1} parent=11 // pred_region
        _
      $region24: #{stdgi_forward.1} parent=11 // pred_fallthru
        _
      // Predicated region
      $region25: #{stdgi_forward.1} parent=11 // pred_check
        %p221 = pneg %p150
      $region26: #{stdgi_forward.1} parent=11 // pred_check_branch
        %223 = sbr.rel (%p221) target = $region28
      $region27: #{stdgi_forward.1} parent=11 // pred_region
        _
      $region28: #{stdgi_forward.1} parent=11 // pred_fallthru
        _
      // Predicated region
      $region29: #{stdgi_forward.1} parent=11 // pred_check
        %p224 = pneg %p171
      $region30: #{stdgi_forward.1} parent=11 // pred_check_branch
        %226 = sbr.rel (%p224) target = $region32
      $region31: #{stdgi_forward.1} parent=11 // pred_region
        _
      $region32: #{stdgi_forward.1} parent=11 // pred_fallthru
        _
    $region12: #{stdgi_forward.1} parent=5 // pred_fallthru
      _
    %p227 = scmp.lt.s32.totalorder %s14, 2
    // Predicated region
    $region33: #{stdgi_forward.1} parent=5 // pred_check
      %p228 = pneg %p227
    $region34: #{stdgi_forward.1} parent=5 // pred_check_branch
      %230 = sbr.rel (%p228) target = $region36
    $region35: #{stdgi_forward.1} parent=5 // pred_region
      // Predicated region
      $region37: #{stdgi_forward.1} parent=35 // pred_check
        %p231 = pneg %p34
      $region38: #{stdgi_forward.1} parent=35 // pred_check_branch
        %233 = sbr.rel (%p231) target = $region40
      $region39: #{stdgi_forward.1} parent=35 // pred_region
        %p234 = scmp.lt.s32.totalorder %s14, 1
        %s235 = scalar_select %p234, %s14, 1
        %s236 = smul.addr %s235, 2
        %s237 = smul.addr %s236, 8
        %s238 = scalar_lea.vmem %s0, %s237
      $region40: #{stdgi_forward.1} parent=35 // pred_fallthru
        _
      // Predicated region
      $region41: #{stdgi_forward.1} parent=35 // pred_check
        %p239 = pneg %p60
      $region42: #{stdgi_forward.1} parent=35 // pred_check_branch
        %241 = sbr.rel (%p239) target = $region44
      $region43: #{stdgi_forward.1} parent=35 // pred_region
        %p242 = scmp.lt.s32.totalorder %s14, 1
        %s243 = scalar_select %p242, %s14, 1
        %s244 = smul.addr %s243, 2
        %s245 = smul.addr %s244, 8
        %s246 = scalar_lea.vmem %s1, %s245
      $region44: #{stdgi_forward.1} parent=35 // pred_fallthru
        _
    $region36: #{stdgi_forward.1} parent=5 // pred_fallthru
      _
    %p247 = scmp.le.s32.totalorder 1, %s14
    %p248 = scmp.lt.s32.totalorder %s14, 3
    %p249 = pnand %p247, %p248
    %p250 = pneg %p249
    // Predicated region
    $region45: #{stdgi_forward.1} parent=5 // pred_check
      _
    $region46: #{stdgi_forward.1} parent=5 // pred_check_branch
      %252 = sbr.rel (%p249) target = $region48
    $region47: #{stdgi_forward.1} parent=5 // pred_region
      %s253 = ssub.s32 %s14, 1
      %p254 = scmp.lt.s32.totalorder %s19, 1
      %s255 = scalar_select %p254, %s19, 1
      %s256 = smul.addr %s255, 2
      %s257 = smul.addr %s256, 8
      %s258 = scalar_lea.vmem %s0, %s257
      %p259 = pneg %p40
      %p260 = pneg %p37
      %p261 = scmp.lt.s32.totalorder %s19, 1
      %s262 = scalar_select %p261, %s19, 1
      %s263 = smul.addr %s262, 2
      %s264 = smul.addr %s263, 8
      %s265 = scalar_lea.vmem %s1, %s264
      %p266 = pneg %p66
      %p267 = pneg %p63
      %p268 = pneg %p87
      %p269 = pneg %p84
      %p270 = pneg %p108
      %p271 = pneg %p105
      %p272 = pneg %p129
      %p273 = pneg %p126
      %p274 = pneg %p150
      %p275 = pneg %p147
      %p276 = pneg %p171
      %p277 = pneg %p168
      %p278 = pneg %p197
      %p279 = pneg %p194
      %p280 = scmp.lt.s32.totalorder %s19, 1
      %s281 = scalar_select %p280, %s19, 1
      %s282 = smul.addr %s281, 2
      %s283 = scalar_lea.vmem %s7, %s282
      %p284 = scmp.lt.s32.totalorder %s19, 1
      %s285 = scalar_select %p284, %s19, 1
      %s286 = smul.addr %s285, 2
      %s287 = smul.addr %s286, 8
      %s288 = scalar_lea.vmem %s0, %s287
      %p289 = scmp.lt.s32.totalorder %s19, 1
      %s290 = scalar_select %p289, %s19, 1
      %s291 = smul.addr %s290, 2
      %s292 = smul.addr %s291, 8
      %s293 = scalar_lea.vmem %s1, %s292
      %p294 = scmp.lt.s32.totalorder %s19, 1
      %s295 = scalar_select %p294, %s19, 1
      %s296 = smul.addr %s295, 2
      %s297 = scalar_lea.vmem %s7, %s296
      %v299 = vld [vmem:[%s288] sm:$0xff]
      %v300 = vld [vmem:[%s288 + $0x8] sm:$0xff]
      %v301 = vld [vmem:[%s293] sm:$0xff]
      %v302 = vld [vmem:[%s293 + $0x8] sm:$0xff]
      %v303 = vpack.c.bf16 %v302, %v301
      %v304 = vpack.c.bf16 %v300, %v299
      %vm305 = vcmask 130048
      %v307 = vsel %vm305, %v303, 0
      %309 = vmatprep.subr.bf16.mxu0 0
      %310 = vmatpush1.bf16.msra.mxu0 %v304
      %311 = vmatprep.subr.bf16.mxu0 0
      %312 = vmatpush1.bf16.msra.mxu0 0
      %313 = vmatprep.subr.bf16.mxu0 0
      %314 = vmatpush1.bf16.msra.mxu0 0
      %315 = vmatprep.subr.bf16.mxu0 0
      %316 = vmatpush1.bf16.msra.mxu0 0
      %317 = vmatprep.subr.bf16.mxu0 0
      %318 = vmatpush1.bf16.msra.mxu0 0
      %319 = vmatprep.subr.bf16.mxu0 0
      %320 = vmatpush1.bf16.msra.mxu0 0
      %321 = vmatprep.subr.bf16.mxu0 0
      %322 = vmatpush1.bf16.msra.mxu0 0
      %323 = vmatprep.subr.bf16.mxu0 0
      %324 = vmatpush1.bf16.msra.mxu0 0
      %325 = vmatprep.subr.bf16.mxu0 0
      %326 = vmatpush1.bf16.msra.mxu0 0
      %327 = vmatprep.subr.bf16.mxu0 0
      %328 = vmatpush1.bf16.msra.mxu0 0
      %329 = vmatprep.subr.bf16.mxu0 0
      %330 = vmatpush1.bf16.msra.mxu0 0
      %331 = vmatprep.subr.bf16.mxu0 0
      %332 = vmatpush1.bf16.msra.mxu0 0
      %333 = vmatprep.subr.bf16.mxu0 0
      %334 = vmatpush1.bf16.msra.mxu0 0
      %335 = vmatprep.subr.bf16.mxu0 0
      %336 = vmatpush1.bf16.msra.mxu0 0
      %337 = vmatprep.subr.bf16.mxu0 0
      %338 = vmatpush1.bf16.msra.mxu0 0
      %339 = vmatprep.subr.bf16.mxu0 0
      %340 = vmatpush1.bf16.msra.mxu0 0
      %341 = vmatprep.mubr.bf16.mxu0 0
      %342 = vmatmul.mubr.bf16.gmra.mrb[0].mxu0 %v307
      %v343 = vpop.f32.mrb[0].mxu0
      %v344 = vadd.f32 0.0, %v343
      %v345 = vpop.f32.mrb[0].mxu0
      %v346 = vpop.f32.mrb[0].mxu0
      %v347 = vadd.f32 0.0, %v346
      %v348 = vpop.f32.mrb[0].mxu0
      %349 = vdwg.mxu0
      %v350 = vpack.c.bf16 %v347, %v344
      %v351 = vld [vmem:[%s3] sm:$0xff]
      %v352 = vld [vmem:[%s3 + $0x8] sm:$0xff]
      %v353 = vld [vmem:[%s3 + $0x10] sm:$0xff]
      %v354 = vld [vmem:[%s3 + $0x18] sm:$0xff]
      %v355 = vld [vmem:[%s3 + $0x20] sm:$0xff]
      %v356 = vld [vmem:[%s3 + $0x28] sm:$0xff]
      %v357 = vld [vmem:[%s3 + $0x30] sm:$0xff]
      %v358 = vld [vmem:[%s3 + $0x38] sm:$0xff]
      %v359 = vld [vmem:[%s3 + $0x40] sm:$0xff]
      %v360 = vld [vmem:[%s3 + $0x48] sm:$0xff]
      %v361 = vld [vmem:[%s3 + $0x50] sm:$0xff]
      %v362 = vpack.c.bf16 %v352, %v351
      %v363 = vpack.c.bf16 %v354, %v353
      %v364 = vpack.c.bf16 %v356, %v355
      %v365 = vpack.c.bf16 %v358, %v357
      %v366 = vpack.c.bf16 %v360, %v359
      %v367 = vpack.c.bf16 %v361, %v361
      %v368 = vld [vmem:[%s4] sm:$0x1]
      %v370 = vlaneseq
      %v371 = vshrl.u32 %v370, 7
      %v372 = vsub.s32 0, %v371
      %v373 = vrot.slane %v368, %v372
      %vm375 = vcmask 719872
      %v377 = vsel %vm375, %v350, 0
      %vm379 = vcmask 1043456
      %v381 = vsel %vm379, %v367, 0
      %383 = vmatprep.subr.bf16.mxu0 0
      %384 = vmatpush1.bf16.msra.mxu0 %v362
      %385 = vmatprep.subr.bf16.mxu0 0
      %386 = vmatpush1.bf16.msra.mxu0 %v363
      %387 = vmatprep.subr.bf16.mxu0 0
      %388 = vmatpush1.bf16.msra.mxu0 %v364
      %389 = vmatprep.subr.bf16.mxu0 0
      %390 = vmatpush1.bf16.msra.mxu0 %v365
      %391 = vmatprep.subr.bf16.mxu0 0
      %392 = vmatpush1.bf16.msra.mxu0 %v366
      %393 = vmatprep.subr.bf16.mxu0 0
      %394 = vmatpush1.bf16.msra.mxu0 %v381
      %395 = vmatprep.subr.bf16.mxu0 0
      %396 = vmatpush1.bf16.msra.mxu0 0
      %397 = vmatprep.subr.bf16.mxu0 0
      %398 = vmatpush1.bf16.msra.mxu0 0
      %399 = vmatprep.subr.bf16.mxu0 0
      %400 = vmatpush1.bf16.msra.mxu0 0
      %401 = vmatprep.subr.bf16.mxu0 0
      %402 = vmatpush1.bf16.msra.mxu0 0
      %403 = vmatprep.subr.bf16.mxu0 0
      %404 = vmatpush1.bf16.msra.mxu0 0
      %405 = vmatprep.subr.bf16.mxu0 0
      %406 = vmatpush1.bf16.msra.mxu0 0
      %407 = vmatprep.subr.bf16.mxu0 0
      %408 = vmatpush1.bf16.msra.mxu0 0
      %409 = vmatprep.subr.bf16.mxu0 0
      %410 = vmatpush1.bf16.msra.mxu0 0
      %411 = vmatprep.subr.bf16.mxu0 0
      %412 = vmatpush1.bf16.msra.mxu0 0
      %413 = vmatprep.subr.bf16.mxu0 0
      %414 = vmatpush1.bf16.msra.mxu0 0
      %415 = vmatprep.mubr.bf16.mxu0 0
      %416 = vmatmul.mubr.bf16.gmra.mrb[0].mxu0 %v377
      %v417 = vpop.f32.mrb[0].mxu0
      %v418 = vadd.f32 %v373, %v417
      %v419 = vpop.f32.mrb[0].mxu0
      %v420 = vpop.f32.mrb[0].mxu0
      %v421 = vadd.f32 %v373, %v420
      %v422 = vpop.f32.mrb[0].mxu0
      %423 = vdwg.mxu0
      %v424 = vmax.f32 %v418, 0.0
      %v425 = vmax.f32 %v421, 0.0
      %v426 = vpack.c.bf16 %v425, %v424
      %v427 = vld [vmem:[%s5] sm:$0xff]
      %v428 = vld [vmem:[%s5 + $0x8] sm:$0xff]
      %v429 = vld [vmem:[%s5 + $0x10] sm:$0xff]
      %v430 = vld [vmem:[%s5 + $0x18] sm:$0xff]
      %v431 = vld [vmem:[%s5 + $0x20] sm:$0xff]
      %v432 = vld [vmem:[%s5 + $0x28] sm:$0xff]
      %v433 = vld [vmem:[%s5 + $0x30] sm:$0xff]
      %v434 = vld [vmem:[%s5 + $0x38] sm:$0xff]
      %v435 = vld [vmem:[%s5 + $0x40] sm:$0xff]
      %v436 = vld [vmem:[%s5 + $0x48] sm:$0xff]
      %v437 = vld [vmem:[%s5 + $0x50] sm:$0xff]
      %v438 = vpack.c.bf16 %v428, %v427
      %v439 = vpack.c.bf16 %v430, %v429
      %v440 = vpack.c.bf16 %v432, %v431
      %v441 = vpack.c.bf16 %v434, %v433
      %v442 = vpack.c.bf16 %v436, %v435
      %v443 = vpack.c.bf16 %v437, %v437
      %v445 = vsel %vm375, %v426, 0
      %v448 = vsel %vm379, %v443, 0
      %450 = vmatprep.subr.bf16.mxu0 0
      %451 = vmatpush1.bf16.msra.mxu0 %v438
      %452 = vmatprep.subr.bf16.mxu0 0
      %453 = vmatpush1.bf16.msra.mxu0 %v439
      %454 = vmatprep.subr.bf16.mxu0 0
      %455 = vmatpush1.bf16.msra.mxu0 %v440
      %456 = vmatprep.subr.bf16.mxu0 0
      %457 = vmatpush1.bf16.msra.mxu0 %v441
      %458 = vmatprep.subr.bf16.mxu0 0
      %459 = vmatpush1.bf16.msra.mxu0 %v442
      %460 = vmatprep.subr.bf16.mxu0 0
      %461 = vmatpush1.bf16.msra.mxu0 %v448
      %462 = vmatprep.subr.bf16.mxu0 0
      %463 = vmatpush1.bf16.msra.mxu0 0
      %464 = vmatprep.subr.bf16.mxu0 0
      %465 = vmatpush1.bf16.msra.mxu0 0
      %466 = vmatprep.subr.bf16.mxu0 0
      %467 = vmatpush1.bf16.msra.mxu0 0
      %468 = vmatprep.subr.bf16.mxu0 0
      %469 = vmatpush1.bf16.msra.mxu0 0
      %470 = vmatprep.subr.bf16.mxu0 0
      %471 = vmatpush1.bf16.msra.mxu0 0
      %472 = vmatprep.subr.bf16.mxu0 0
      %473 = vmatpush1.bf16.msra.mxu0 0
      %474 = vmatprep.subr.bf16.mxu0 0
      %475 = vmatpush1.bf16.msra.mxu0 0
      %476 = vmatprep.subr.bf16.mxu0 0
      %477 = vmatpush1.bf16.msra.mxu0 0
      %478 = vmatprep.subr.bf16.mxu0 0
      %479 = vmatpush1.bf16.msra.mxu0 0
      %480 = vmatprep.subr.bf16.mxu0 0
      %481 = vmatpush1.bf16.msra.mxu0 0
      %482 = vmatprep.mubr.bf16.mxu0 0
      %483 = vmatmul.mubr.bf16.gmra.mrb[0].mxu0 %v445
      %v484 = vpop.f32.mrb[0].mxu0
      %v485 = vadd.f32 0.0, %v484
      %v486 = vpop.f32.mrb[0].mxu0
      %v487 = vpop.f32.mrb[0].mxu0
      %v488 = vadd.f32 0.0, %v487
      %v489 = vpop.f32.mrb[0].mxu0
      %490 = vdwg.mxu0
      %493 = vrot.lane.b32.xlu0 %v299, 120
      %v494 = vpop.permute.xlu0 %493
      %495 = vrot.lane.b32.xlu0 %v300, 120
      %v496 = vpop.permute.xlu0 %495
      %v499 = vmul.f32 %v485, %v494
      %v500 = vmul.f32 %v488, %v496
      %v501 = vsel %vm375, %v499, 0.0
      %502 = vadd.xlane.f32.xlu0 %v501
      %v503 = vpop.xlane.xlu0 %502
      %v504 = vsel %vm375, %v500, 0.0
      %505 = vadd.xlane.f32.xlu0 %v504
      %v506 = vpop.xlane.xlu0 %505
      %v507 = vld [vmem:[%s2] sm:$0xff]
      %v508 = vld [vmem:[%s2 + $0x8] sm:$0xff]
      %v509 = vlaneseq
      %v510 = vand.u32 %v509, 127
      %511 = vset.pattern.permute.xlu0 0
      %512 = vperm.xlu0 %511, %v507
      %v513 = vpop.permute.xlu0 %512
      %514 = vset.pattern.permute.xlu0 0
      %515 = vperm.xlu0 %514, %v508
      %v516 = vpop.permute.xlu0 %515
      %vm517 = vcmp.eq.s32.totalorder %v513, %v510
      %vm518 = vcmp.eq.s32.totalorder %v516, %v510
      %v519 = vsel %vm517, 1, 0
      %v520 = vsel %vm518, 1, 0
      %v521 = vcvt.s32.f32 %v519
      %v522 = vcvt.s32.f32 %v520
      %v524 = vsel %vm305, %v521, 0
      %v527 = vsel %vm305, %v522, 0
      %529 = vmatprep.subr.mxu0 0.0
      %530 = vmatpush1.msra.mxu0 %v494
      %531 = vmatprep.subr.mxu0 0.0
      %532 = vmatpush1.msra.mxu0 %v496
      %533 = vmatprep.subr.mxu0 0.0
      %534 = vmatpush1.msra.mxu0 0.0
      %535 = vmatprep.subr.mxu0 0.0
      %536 = vmatpush1.msra.mxu0 0.0
      %537 = vmatprep.subr.mxu0 0.0
      %538 = vmatpush1.msra.mxu0 0.0
      %539 = vmatprep.subr.mxu0 0.0
      %540 = vmatpush1.msra.mxu0 0.0
      %541 = vmatprep.subr.mxu0 0.0
      %542 = vmatpush1.msra.mxu0 0.0
      %543 = vmatprep.subr.mxu0 0.0
      %544 = vmatpush1.msra.mxu0 0.0
      %545 = vmatprep.subr.mxu0 0.0
      %546 = vmatpush1.msra.mxu0 0.0
      %547 = vmatprep.subr.mxu0 0.0
      %548 = vmatpush1.msra.mxu0 0.0
      %549 = vmatprep.subr.mxu0 0.0
      %550 = vmatpush1.msra.mxu0 0.0
      %551 = vmatprep.subr.mxu0 0.0
      %552 = vmatpush1.msra.mxu0 0.0
      %553 = vmatprep.subr.mxu0 0.0
      %554 = vmatpush1.msra.mxu0 0.0
      %555 = vmatprep.subr.mxu0 0.0
      %556 = vmatpush1.msra.mxu0 0.0
      %557 = vmatprep.subr.mxu0 0.0
      %558 = vmatpush1.msra.mxu0 0.0
      %559 = vmatprep.subr.mxu0 0.0
      %560 = vmatpush1.msra.mxu0 0.0
      %561 = vmatprep.subr.mxu0 0.0
      %562 = vmatpush1.msra.mxu0 0.0
      %563 = vmatprep.subr.mxu0 0.0
      %564 = vmatpush1.msra.mxu0 0.0
      %565 = vmatprep.subr.mxu0 0.0
      %566 = vmatpush1.msra.mxu0 0.0
      %567 = vmatprep.subr.mxu0 0.0
      %568 = vmatpush1.msra.mxu0 0.0
      %569 = vmatprep.subr.mxu0 0.0
      %570 = vmatpush1.msra.mxu0 0.0
      %571 = vmatprep.subr.mxu0 0.0
      %572 = vmatpush1.msra.mxu0 0.0
      %573 = vmatprep.subr.mxu0 0.0
      %574 = vmatpush1.msra.mxu0 0.0
      %575 = vmatprep.subr.mxu0 0.0
      %576 = vmatpush1.msra.mxu0 0.0
      %577 = vmatprep.subr.mxu0 0.0
      %578 = vmatpush1.msra.mxu0 0.0
      %579 = vmatprep.subr.mxu0 0.0
      %580 = vmatpush1.msra.mxu0 0.0
      %581 = vmatprep.subr.mxu0 0.0
      %582 = vmatpush1.msra.mxu0 0.0
      %583 = vmatprep.subr.mxu0 0.0
      %584 = vmatpush1.msra.mxu0 0.0
      %585 = vmatprep.subr.mxu0 0.0
      %586 = vmatpush1.msra.mxu0 0.0
      %587 = vmatprep.subr.mxu0 0.0
      %588 = vmatpush1.msra.mxu0 0.0
      %589 = vmatprep.subr.mxu0 0.0
      %590 = vmatpush1.msra.mxu0 0.0
      %591 = vmatprep.subr.mxu0 0.0
      %592 = vmatpush1.msra.mxu0 0.0
      %593 = vmatprep.mubr.f32.mxu0 0.0
      %594 = vmatmul.mubr.f32.gmra.mrb[0].mxu0 %v524
      %v595 = vpop.f32.mrb[0].mxu0
      %v596 = vadd.f32 0.0, %v595
      %v597 = vpop.f32.mrb[0].mxu0
      %598 = vmatprep.mubr.f32.mxu0 0.0
      %599 = vmatmul.mubr.f32.gmra.mrb[0].mxu0 %v527
      %v600 = vpop.f32.mrb[0].mxu0
      %v601 = vadd.f32 0.0, %v600
      %v602 = vpop.f32.mrb[0].mxu0
      %603 = vdwg.mxu0
      %v604 = vmul.f32 %v485, %v596
      %v605 = vmul.f32 %v488, %v601
      %vm606 = vcmask 64512
      %v607 = vsel %vm606, %v604, 0.0
      %608 = vadd.xlane.f32.xlu0 %v607
      %v609 = vpop.xlane.xlu0 %608
      %v610 = vsel %vm606, %v605, 0.0
      %611 = vadd.xlane.f32.xlu0 %v610
      %v612 = vpop.xlane.xlu0 %611
      %v613 = vadd.f32 %v609, 0.0
      %v614 = vadd.f32 %v612, 0.0
      %615 = vset.pattern.permute.xlu0 1
      %616 = vperm.xlu0 %615, %v507
      %v617 = vpop.permute.xlu0 %616
      %618 = vset.pattern.permute.xlu0 1
      %619 = vperm.xlu0 %618, %v508
      %v620 = vpop.permute.xlu0 %619
      %vm621 = vcmp.eq.s32.totalorder %v617, %v510
      %vm622 = vcmp.eq.s32.totalorder %v620, %v510
      %v623 = vsel %vm621, 1, 0
      %v624 = vsel %vm622, 1, 0
      %v625 = vcvt.s32.f32 %v623
      %v626 = vcvt.s32.f32 %v624
      %627 = vrot.lane.b32.xlu0 %v299, 112
      %v628 = vpop.permute.xlu0 %627
      %629 = vrot.lane.b32.xlu0 %v300, 112
      %v630 = vpop.permute.xlu0 %629
      %v634 = vsel %vm305, %v625, 0
      %v637 = vsel %vm305, %v626, 0
      %639 = vmatprep.subr.mxu0 0.0
      %640 = vmatpush1.msra.mxu0 %v628
      %641 = vmatprep.subr.mxu0 0.0
      %642 = vmatpush1.msra.mxu0 %v630
      %643 = vmatprep.subr.mxu0 0.0
      %644 = vmatpush1.msra.mxu0 0.0
      %645 = vmatprep.subr.mxu0 0.0
      %646 = vmatpush1.msra.mxu0 0.0
      %647 = vmatprep.subr.mxu0 0.0
      %648 = vmatpush1.msra.mxu0 0.0
      %649 = vmatprep.subr.mxu0 0.0
      %650 = vmatpush1.msra.mxu0 0.0
      %651 = vmatprep.subr.mxu0 0.0
      %652 = vmatpush1.msra.mxu0 0.0
      %653 = vmatprep.subr.mxu0 0.0
      %654 = vmatpush1.msra.mxu0 0.0
      %655 = vmatprep.subr.mxu0 0.0
      %656 = vmatpush1.msra.mxu0 0.0
      %657 = vmatprep.subr.mxu0 0.0
      %658 = vmatpush1.msra.mxu0 0.0
      %659 = vmatprep.subr.mxu0 0.0
      %660 = vmatpush1.msra.mxu0 0.0
      %661 = vmatprep.subr.mxu0 0.0
      %662 = vmatpush1.msra.mxu0 0.0
      %663 = vmatprep.subr.mxu0 0.0
      %664 = vmatpush1.msra.mxu0 0.0
      %665 = vmatprep.subr.mxu0 0.0
      %666 = vmatpush1.msra.mxu0 0.0
      %667 = vmatprep.subr.mxu0 0.0
      %668 = vmatpush1.msra.mxu0 0.0
      %669 = vmatprep.subr.mxu0 0.0
      %670 = vmatpush1.msra.mxu0 0.0
      %671 = vmatprep.subr.mxu0 0.0
      %672 = vmatpush1.msra.mxu0 0.0
      %673 = vmatprep.subr.mxu0 0.0
      %674 = vmatpush1.msra.mxu0 0.0
      %675 = vmatprep.subr.mxu0 0.0
      %676 = vmatpush1.msra.mxu0 0.0
      %677 = vmatprep.subr.mxu0 0.0
      %678 = vmatpush1.msra.mxu0 0.0
      %679 = vmatprep.subr.mxu0 0.0
      %680 = vmatpush1.msra.mxu0 0.0
      %681 = vmatprep.subr.mxu0 0.0
      %682 = vmatpush1.msra.mxu0 0.0
      %683 = vmatprep.subr.mxu0 0.0
      %684 = vmatpush1.msra.mxu0 0.0
      %685 = vmatprep.subr.mxu0 0.0
      %686 = vmatpush1.msra.mxu0 0.0
      %687 = vmatprep.subr.mxu0 0.0
      %688 = vmatpush1.msra.mxu0 0.0
      %689 = vmatprep.subr.mxu0 0.0
      %690 = vmatpush1.msra.mxu0 0.0
      %691 = vmatprep.subr.mxu0 0.0
      %692 = vmatpush1.msra.mxu0 0.0
      %693 = vmatprep.subr.mxu0 0.0
      %694 = vmatpush1.msra.mxu0 0.0
      %695 = vmatprep.subr.mxu0 0.0
      %696 = vmatpush1.msra.mxu0 0.0
      %697 = vmatprep.subr.mxu0 0.0
      %698 = vmatpush1.msra.mxu0 0.0
      %699 = vmatprep.subr.mxu0 0.0
      %700 = vmatpush1.msra.mxu0 0.0
      %701 = vmatprep.subr.mxu0 0.0
      %702 = vmatpush1.msra.mxu0 0.0
      %703 = vmatprep.mubr.f32.mxu0 0.0
      %704 = vmatmul.mubr.f32.gmra.mrb[0].mxu0 %v634
      %v705 = vpop.f32.mrb[0].mxu0
      %v706 = vadd.f32 0.0, %v705
      %v707 = vpop.f32.mrb[0].mxu0
      %708 = vmatprep.mubr.f32.mxu0 0.0
      %709 = vmatmul.mubr.f32.gmra.mrb[0].mxu0 %v637
      %v710 = vpop.f32.mrb[0].mxu0
      %v711 = vadd.f32 0.0, %v710
      %v712 = vpop.f32.mrb[0].mxu0
      %713 = vdwg.mxu0
      %716 = vrot.lane.b32.xlu0 %v706, 8
      %v717 = vpop.permute.xlu0 %716
      %718 = vrot.lane.b32.xlu0 %v711, 8
      %v719 = vpop.permute.xlu0 %718
      %v722 = vmul.f32 %v485, %v717
      %v723 = vmul.f32 %v488, %v719
      %726 = vrot.lane.b32.xlu0 %v722, 120
      %v727 = vpop.permute.xlu0 %726
      %728 = vrot.lane.b32.xlu0 %v723, 120
      %v729 = vpop.permute.xlu0 %728
      %v732 = vsel %vm606, %v727, 0.0
      %733 = vadd.xlane.f32.xlu0 %v732
      %v734 = vpop.xlane.xlu0 %733
      %v735 = vsel %vm606, %v729, 0.0
      %736 = vadd.xlane.f32.xlu0 %v735
      %v737 = vpop.xlane.xlu0 %736
      %v738 = vadd.f32 %v613, %v734
      %v739 = vadd.f32 %v614, %v737
      %740 = vset.pattern.permute.xlu0 2
      %741 = vperm.xlu0 %740, %v507
      %v742 = vpop.permute.xlu0 %741
      %743 = vset.pattern.permute.xlu0 2
      %744 = vperm.xlu0 %743, %v508
      %v745 = vpop.permute.xlu0 %744
      %vm746 = vcmp.eq.s32.totalorder %v742, %v510
      %vm747 = vcmp.eq.s32.totalorder %v745, %v510
      %v748 = vsel %vm746, 1, 0
      %v749 = vsel %vm747, 1, 0
      %v750 = vcvt.s32.f32 %v748
      %v751 = vcvt.s32.f32 %v749
      %752 = vrot.lane.b32.xlu0 %v299, 104
      %v753 = vpop.permute.xlu0 %752
      %754 = vrot.lane.b32.xlu0 %v300, 104
      %v755 = vpop.permute.xlu0 %754
      %v759 = vsel %vm305, %v750, 0
      %v762 = vsel %vm305, %v751, 0
      %764 = vmatprep.subr.mxu0 0.0
      %765 = vmatpush1.msra.mxu0 %v753
      %766 = vmatprep.subr.mxu0 0.0
      %767 = vmatpush1.msra.mxu0 %v755
      %768 = vmatprep.subr.mxu0 0.0
      %769 = vmatpush1.msra.mxu0 0.0
      %770 = vmatprep.subr.mxu0 0.0
      %771 = vmatpush1.msra.mxu0 0.0
      %772 = vmatprep.subr.mxu0 0.0
      %773 = vmatpush1.msra.mxu0 0.0
      %774 = vmatprep.subr.mxu0 0.0
      %775 = vmatpush1.msra.mxu0 0.0
      %776 = vmatprep.subr.mxu0 0.0
      %777 = vmatpush1.msra.mxu0 0.0
      %778 = vmatprep.subr.mxu0 0.0
      %779 = vmatpush1.msra.mxu0 0.0
      %780 = vmatprep.subr.mxu0 0.0
      %781 = vmatpush1.msra.mxu0 0.0
      %782 = vmatprep.subr.mxu0 0.0
      %783 = vmatpush1.msra.mxu0 0.0
      %784 = vmatprep.subr.mxu0 0.0
      %785 = vmatpush1.msra.mxu0 0.0
      %786 = vmatprep.subr.mxu0 0.0
      %787 = vmatpush1.msra.mxu0 0.0
      %788 = vmatprep.subr.mxu0 0.0
      %789 = vmatpush1.msra.mxu0 0.0
      %790 = vmatprep.subr.mxu0 0.0
      %791 = vmatpush1.msra.mxu0 0.0
      %792 = vmatprep.subr.mxu0 0.0
      %793 = vmatpush1.msra.mxu0 0.0
      %794 = vmatprep.subr.mxu0 0.0
      %795 = vmatpush1.msra.mxu0 0.0
      %796 = vmatprep.subr.mxu0 0.0
      %797 = vmatpush1.msra.mxu0 0.0
      %798 = vmatprep.subr.mxu0 0.0
      %799 = vmatpush1.msra.mxu0 0.0
      %800 = vmatprep.subr.mxu0 0.0
      %801 = vmatpush1.msra.mxu0 0.0
      %802 = vmatprep.subr.mxu0 0.0
      %803 = vmatpush1.msra.mxu0 0.0
      %804 = vmatprep.subr.mxu0 0.0
      %805 = vmatpush1.msra.mxu0 0.0
      %806 = vmatprep.subr.mxu0 0.0
      %807 = vmatpush1.msra.mxu0 0.0
      %808 = vmatprep.subr.mxu0 0.0
      %809 = vmatpush1.msra.mxu0 0.0
      %810 = vmatprep.subr.mxu0 0.0
      %811 = vmatpush1.msra.mxu0 0.0
      %812 = vmatprep.subr.mxu0 0.0
      %813 = vmatpush1.msra.mxu0 0.0
      %814 = vmatprep.subr.mxu0 0.0
      %815 = vmatpush1.msra.mxu0 0.0
      %816 = vmatprep.subr.mxu0 0.0
      %817 = vmatpush1.msra.mxu0 0.0
      %818 = vmatprep.subr.mxu0 0.0
      %819 = vmatpush1.msra.mxu0 0.0
      %820 = vmatprep.subr.mxu0 0.0
      %821 = vmatpush1.msra.mxu0 0.0
      %822 = vmatprep.subr.mxu0 0.0
      %823 = vmatpush1.msra.mxu0 0.0
      %824 = vmatprep.subr.mxu0 0.0
      %825 = vmatpush1.msra.mxu0 0.0
      %826 = vmatprep.subr.mxu0 0.0
      %827 = vmatpush1.msra.mxu0 0.0
      %828 = vmatprep.mubr.f32.mxu0 0.0
      %829 = vmatmul.mubr.f32.gmra.mrb[0].mxu0 %v759
      %v830 = vpop.f32.mrb[0].mxu0
      %v831 = vadd.f32 0.0, %v830
      %v832 = vpop.f32.mrb[0].mxu0
      %833 = vmatprep.mubr.f32.mxu0 0.0
      %834 = vmatmul.mubr.f32.gmra.mrb[0].mxu0 %v762
      %v835 = vpop.f32.mrb[0].mxu0
      %v836 = vadd.f32 0.0, %v835
      %v837 = vpop.f32.mrb[0].mxu0
      %838 = vdwg.mxu0
      %841 = vrot.lane.b32.xlu0 %v831, 16
      %v842 = vpop.permute.xlu0 %841
      %843 = vrot.lane.b32.xlu0 %v836, 16
      %v844 = vpop.permute.xlu0 %843
      %v847 = vmul.f32 %v485, %v842
      %v848 = vmul.f32 %v488, %v844
      %851 = vrot.lane.b32.xlu0 %v847, 112
      %v852 = vpop.permute.xlu0 %851
      %853 = vrot.lane.b32.xlu0 %v848, 112
      %v854 = vpop.permute.xlu0 %853
      %v857 = vsel %vm606, %v852, 0.0
      %858 = vadd.xlane.f32.xlu0 %v857
      %v859 = vpop.xlane.xlu0 %858
      %v860 = vsel %vm606, %v854, 0.0
      %861 = vadd.xlane.f32.xlu0 %v860
      %v862 = vpop.xlane.xlu0 %861
      %v863 = vadd.f32 %v738, %v859
      %v864 = vadd.f32 %v739, %v862
      %865 = vset.pattern.permute.xlu0 3
      %866 = vperm.xlu0 %865, %v507
      %v867 = vpop.permute.xlu0 %866
      %868 = vset.pattern.permute.xlu0 3
      %869 = vperm.xlu0 %868, %v508
      %v870 = vpop.permute.xlu0 %869
      %vm871 = vcmp.eq.s32.totalorder %v867, %v510
      %vm872 = vcmp.eq.s32.totalorder %v870, %v510
      %v873 = vsel %vm871, 1, 0
      %v874 = vsel %vm872, 1, 0
      %v875 = vcvt.s32.f32 %v873
      %v876 = vcvt.s32.f32 %v874
      %877 = vrot.lane.b32.xlu0 %v299, 96
      %v878 = vpop.permute.xlu0 %877
      %879 = vrot.lane.b32.xlu0 %v300, 96
      %v880 = vpop.permute.xlu0 %879
      %v884 = vsel %vm305, %v875, 0
      %v887 = vsel %vm305, %v876, 0
      %889 = vmatprep.subr.mxu0 0.0
      %890 = vmatpush1.msra.mxu0 %v878
      %891 = vmatprep.subr.mxu0 0.0
      %892 = vmatpush1.msra.mxu0 %v880
      %893 = vmatprep.subr.mxu0 0.0
      %894 = vmatpush1.msra.mxu0 0.0
      %895 = vmatprep.subr.mxu0 0.0
      %896 = vmatpush1.msra.mxu0 0.0
      %897 = vmatprep.subr.mxu0 0.0
      %898 = vmatpush1.msra.mxu0 0.0
      %899 = vmatprep.subr.mxu0 0.0
      %900 = vmatpush1.msra.mxu0 0.0
      %901 = vmatprep.subr.mxu0 0.0
      %902 = vmatpush1.msra.mxu0 0.0
      %903 = vmatprep.subr.mxu0 0.0
      %904 = vmatpush1.msra.mxu0 0.0
      %905 = vmatprep.subr.mxu0 0.0
      %906 = vmatpush1.msra.mxu0 0.0
      %907 = vmatprep.subr.mxu0 0.0
      %908 = vmatpush1.msra.mxu0 0.0
      %909 = vmatprep.subr.mxu0 0.0
      %910 = vmatpush1.msra.mxu0 0.0
      %911 = vmatprep.subr.mxu0 0.0
      %912 = vmatpush1.msra.mxu0 0.0
      %913 = vmatprep.subr.mxu0 0.0
      %914 = vmatpush1.msra.mxu0 0.0
      %915 = vmatprep.subr.mxu0 0.0
      %916 = vmatpush1.msra.mxu0 0.0
      %917 = vmatprep.subr.mxu0 0.0
      %918 = vmatpush1.msra.mxu0 0.0
      %919 = vmatprep.subr.mxu0 0.0
      %920 = vmatpush1.msra.mxu0 0.0
      %921 = vmatprep.subr.mxu0 0.0
      %922 = vmatpush1.msra.mxu0 0.0
      %923 = vmatprep.subr.mxu0 0.0
      %924 = vmatpush1.msra.mxu0 0.0
      %925 = vmatprep.subr.mxu0 0.0
      %926 = vmatpush1.msra.mxu0 0.0
      %927 = vmatprep.subr.mxu0 0.0
      %928 = vmatpush1.msra.mxu0 0.0
      %929 = vmatprep.subr.mxu0 0.0
      %930 = vmatpush1.msra.mxu0 0.0
      %931 = vmatprep.subr.mxu0 0.0
      %932 = vmatpush1.msra.mxu0 0.0
      %933 = vmatprep.subr.mxu0 0.0
      %934 = vmatpush1.msra.mxu0 0.0
      %935 = vmatprep.subr.mxu0 0.0
      %936 = vmatpush1.msra.mxu0 0.0
      %937 = vmatprep.subr.mxu0 0.0
      %938 = vmatpush1.msra.mxu0 0.0
      %939 = vmatprep.subr.mxu0 0.0
      %940 = vmatpush1.msra.mxu0 0.0
      %941 = vmatprep.subr.mxu0 0.0
      %942 = vmatpush1.msra.mxu0 0.0
      %943 = vmatprep.subr.mxu0 0.0
      %944 = vmatpush1.msra.mxu0 0.0
      %945 = vmatprep.subr.mxu0 0.0
      %946 = vmatpush1.msra.mxu0 0.0
      %947 = vmatprep.subr.mxu0 0.0
      %948 = vmatpush1.msra.mxu0 0.0
      %949 = vmatprep.subr.mxu0 0.0
      %950 = vmatpush1.msra.mxu0 0.0
      %951 = vmatprep.subr.mxu0 0.0
      %952 = vmatpush1.msra.mxu0 0.0
      %953 = vmatprep.mubr.f32.mxu0 0.0
      %954 = vmatmul.mubr.f32.gmra.mrb[0].mxu0 %v884
      %v955 = vpop.f32.mrb[0].mxu0
      %v956 = vadd.f32 0.0, %v955
      %v957 = vpop.f32.mrb[0].mxu0
      %958 = vmatprep.mubr.f32.mxu0 0.0
      %959 = vmatmul.mubr.f32.gmra.mrb[0].mxu0 %v887
      %v960 = vpop.f32.mrb[0].mxu0
      %v961 = vadd.f32 0.0, %v960
      %v962 = vpop.f32.mrb[0].mxu0
      %963 = vdwg.mxu0
      %966 = vrot.lane.b32.xlu0 %v956, 24
      %v967 = vpop.permute.xlu0 %966
      %968 = vrot.lane.b32.xlu0 %v961, 24
      %v969 = vpop.permute.xlu0 %968
      %v972 = vmul.f32 %v485, %v967
      %v973 = vmul.f32 %v488, %v969
      %976 = vrot.lane.b32.xlu0 %v972, 104
      %v977 = vpop.permute.xlu0 %976
      %978 = vrot.lane.b32.xlu0 %v973, 104
      %v979 = vpop.permute.xlu0 %978
      %v982 = vsel %vm606, %v977, 0.0
      %983 = vadd.xlane.f32.xlu0 %v982
      %v984 = vpop.xlane.xlu0 %983
      %v985 = vsel %vm606, %v979, 0.0
      %986 = vadd.xlane.f32.xlu0 %v985
      %v987 = vpop.xlane.xlu0 %986
      %v988 = vadd.f32 %v863, %v984
      %v989 = vadd.f32 %v864, %v987
      %990 = vset.pattern.permute.xlu0 4
      %991 = vperm.xlu0 %990, %v507
      %v992 = vpop.permute.xlu0 %991
      %993 = vset.pattern.permute.xlu0 4
      %994 = vperm.xlu0 %993, %v508
      %v995 = vpop.permute.xlu0 %994
      %vm996 = vcmp.eq.s32.totalorder %v992, %v510
      %vm997 = vcmp.eq.s32.totalorder %v995, %v510
      %v998 = vsel %vm996, 1, 0
      %v999 = vsel %vm997, 1, 0
      %v1000 = vcvt.s32.f32 %v998
      %v1001 = vcvt.s32.f32 %v999
      %1002 = vrot.lane.b32.xlu0 %v299, 88
      %v1003 = vpop.permute.xlu0 %1002
      %1004 = vrot.lane.b32.xlu0 %v300, 88
      %v1005 = vpop.permute.xlu0 %1004
      %v1009 = vsel %vm305, %v1000, 0
      %v1012 = vsel %vm305, %v1001, 0
      %1014 = vmatprep.subr.mxu0 0.0
      %1015 = vmatpush1.msra.mxu0 %v1003
      %1016 = vmatprep.subr.mxu0 0.0
      %1017 = vmatpush1.msra.mxu0 %v1005
      %1018 = vmatprep.subr.mxu0 0.0
      %1019 = vmatpush1.msra.mxu0 0.0
      %1020 = vmatprep.subr.mxu0 0.0
      %1021 = vmatpush1.msra.mxu0 0.0
      %1022 = vmatprep.subr.mxu0 0.0
      %1023 = vmatpush1.msra.mxu0 0.0
      %1024 = vmatprep.subr.mxu0 0.0
      %1025 = vmatpush1.msra.mxu0 0.0
      %1026 = vmatprep.subr.mxu0 0.0
      %1027 = vmatpush1.msra.mxu0 0.0
      %1028 = vmatprep.subr.mxu0 0.0
      %1029 = vmatpush1.msra.mxu0 0.0
      %1030 = vmatprep.subr.mxu0 0.0
      %1031 = vmatpush1.msra.mxu0 0.0
      %1032 = vmatprep.subr.mxu0 0.0
      %1033 = vmatpush1.msra.mxu0 0.0
      %1034 = vmatprep.subr.mxu0 0.0
      %1035 = vmatpush1.msra.mxu0 0.0
      %1036 = vmatprep.subr.mxu0 0.0
      %1037 = vmatpush1.msra.mxu0 0.0
      %1038 = vmatprep.subr.mxu0 0.0
      %1039 = vmatpush1.msra.mxu0 0.0
      %1040 = vmatprep.subr.mxu0 0.0
      %1041 = vmatpush1.msra.mxu0 0.0
      %1042 = vmatprep.subr.mxu0 0.0
      %1043 = vmatpush1.msra.mxu0 0.0
      %1044 = vmatprep.subr.mxu0 0.0
      %1045 = vmatpush1.msra.mxu0 0.0
      %1046 = vmatprep.subr.mxu0 0.0
      %1047 = vmatpush1.msra.mxu0 0.0
      %1048 = vmatprep.subr.mxu0 0.0
      %1049 = vmatpush1.msra.mxu0 0.0
      %1050 = vmatprep.subr.mxu0 0.0
      %1051 = vmatpush1.msra.mxu0 0.0
      %1052 = vmatprep.subr.mxu0 0.0
      %1053 = vmatpush1.msra.mxu0 0.0
      %1054 = vmatprep.subr.mxu0 0.0
      %1055 = vmatpush1.msra.mxu0 0.0
      %1056 = vmatprep.subr.mxu0 0.0
      %1057 = vmatpush1.msra.mxu0 0.0
      %1058 = vmatprep.subr.mxu0 0.0
      %1059 = vmatpush1.msra.mxu0 0.0
      %1060 = vmatprep.subr.mxu0 0.0
      %1061 = vmatpush1.msra.mxu0 0.0
      %1062 = vmatprep.subr.mxu0 0.0
      %1063 = vmatpush1.msra.mxu0 0.0
      %1064 = vmatprep.subr.mxu0 0.0
      %1065 = vmatpush1.msra.mxu0 0.0
      %1066 = vmatprep.subr.mxu0 0.0
      %1067 = vmatpush1.msra.mxu0 0.0
      %1068 = vmatprep.subr.mxu0 0.0
      %1069 = vmatpush1.msra.mxu0 0.0
      %1070 = vmatprep.subr.mxu0 0.0
      %1071 = vmatpush1.msra.mxu0 0.0
      %1072 = vmatprep.subr.mxu0 0.0
      %1073 = vmatpush1.msra.mxu0 0.0
      %1074 = vmatprep.subr.mxu0 0.0
      %1075 = vmatpush1.msra.mxu0 0.0
      %1076 = vmatprep.subr.mxu0 0.0
      %1077 = vmatpush1.msra.mxu0 0.0
      %1078 = vmatprep.mubr.f32.mxu0 0.0
      %1079 = vmatmul.mubr.f32.gmra.mrb[0].mxu0 %v1009
      %v1080 = vpop.f32.mrb[0].mxu0
      %v1081 = vadd.f32 0.0, %v1080
      %v1082 = vpop.f32.mrb[0].mxu0
      %1083 = vmatprep.mubr.f32.mxu0 0.0
      %1084 = vmatmul.mubr.f32.gmra.mrb[0].mxu0 %v1012
      %v1085 = vpop.f32.mrb[0].mxu0
      %v1086 = vadd.f32 0.0, %v1085
      %v1087 = vpop.f32.mrb[0].mxu0
      %1088 = vdwg.mxu0
      %1091 = vrot.lane.b32.xlu0 %v1081, 32
      %v1092 = vpop.permute.xlu0 %1091
      %1093 = vrot.lane.b32.xlu0 %v1086, 32
      %v1094 = vpop.permute.xlu0 %1093
      %v1097 = vmul.f32 %v485, %v1092
      %v1098 = vmul.f32 %v488, %v1094
      %1101 = vrot.lane.b32.xlu0 %v1097, 96
      %v1102 = vpop.permute.xlu0 %1101
      %1103 = vrot.lane.b32.xlu0 %v1098, 96
      %v1104 = vpop.permute.xlu0 %1103
      %v1107 = vsel %vm606, %v1102, 0.0
      %1108 = vadd.xlane.f32.xlu0 %v1107
      %v1109 = vpop.xlane.xlu0 %1108
      %v1110 = vsel %vm606, %v1104, 0.0
      %1111 = vadd.xlane.f32.xlu0 %v1110
      %v1112 = vpop.xlane.xlu0 %1111
      %v1113 = vadd.f32 %v988, %v1109
      %v1114 = vadd.f32 %v989, %v1112
      %1115 = vset.pattern.permute.xlu0 5
      %1116 = vperm.xlu0 %1115, %v507
      %v1117 = vpop.permute.xlu0 %1116
      %1118 = vset.pattern.permute.xlu0 5
      %1119 = vperm.xlu0 %1118, %v508
      %v1120 = vpop.permute.xlu0 %1119
      %vm1121 = vcmp.eq.s32.totalorder %v1117, %v510
      %vm1122 = vcmp.eq.s32.totalorder %v1120, %v510
      %v1123 = vsel %vm1121, 1, 0
      %v1124 = vsel %vm1122, 1, 0
      %v1125 = vcvt.s32.f32 %v1123
      %v1126 = vcvt.s32.f32 %v1124
      %1127 = vrot.lane.b32.xlu0 %v299, 80
      %v1128 = vpop.permute.xlu0 %1127
      %1129 = vrot.lane.b32.xlu0 %v300, 80
      %v1130 = vpop.permute.xlu0 %1129
      %v1134 = vsel %vm305, %v1125, 0
      %v1137 = vsel %vm305, %v1126, 0
      %1139 = vmatprep.subr.mxu0 0.0
      %1140 = vmatpush1.msra.mxu0 %v1128
      %1141 = vmatprep.subr.mxu0 0.0
      %1142 = vmatpush1.msra.mxu0 %v1130
      %1143 = vmatprep.subr.mxu0 0.0
      %1144 = vmatpush1.msra.mxu0 0.0
      %1145 = vmatprep.subr.mxu0 0.0
      %1146 = vmatpush1.msra.mxu0 0.0
      %1147 = vmatprep.subr.mxu0 0.0
      %1148 = vmatpush1.msra.mxu0 0.0
      %1149 = vmatprep.subr.mxu0 0.0
      %1150 = vmatpush1.msra.mxu0 0.0
      %1151 = vmatprep.subr.mxu0 0.0
      %1152 = vmatpush1.msra.mxu0 0.0
      %1153 = vmatprep.subr.mxu0 0.0
      %1154 = vmatpush1.msra.mxu0 0.0
      %1155 = vmatprep.subr.mxu0 0.0
      %1156 = vmatpush1.msra.mxu0 0.0
      %1157 = vmatprep.subr.mxu0 0.0
      %1158 = vmatpush1.msra.mxu0 0.0
      %1159 = vmatprep.subr.mxu0 0.0
      %1160 = vmatpush1.msra.mxu0 0.0
      %1161 = vmatprep.subr.mxu0 0.0
      %1162 = vmatpush1.msra.mxu0 0.0
      %1163 = vmatprep.subr.mxu0 0.0
      %1164 = vmatpush1.msra.mxu0 0.0
      %1165 = vmatprep.subr.mxu0 0.0
      %1166 = vmatpush1.msra.mxu0 0.0
      %1167 = vmatprep.subr.mxu0 0.0
      %1168 = vmatpush1.msra.mxu0 0.0
      %1169 = vmatprep.subr.mxu0 0.0
      %1170 = vmatpush1.msra.mxu0 0.0
      %1171 = vmatprep.subr.mxu0 0.0
      %1172 = vmatpush1.msra.mxu0 0.0
      %1173 = vmatprep.subr.mxu0 0.0
      %1174 = vmatpush1.msra.mxu0 0.0
      %1175 = vmatprep.subr.mxu0 0.0
      %1176 = vmatpush1.msra.mxu0 0.0
      %1177 = vmatprep.subr.mxu0 0.0
      %1178 = vmatpush1.msra.mxu0 0.0
      %1179 = vmatprep.subr.mxu0 0.0
      %1180 = vmatpush1.msra.mxu0 0.0
      %1181 = vmatprep.subr.mxu0 0.0
      %1182 = vmatpush1.msra.mxu0 0.0
      %1183 = vmatprep.subr.mxu0 0.0
      %1184 = vmatpush1.msra.mxu0 0.0
      %1185 = vmatprep.subr.mxu0 0.0
      %1186 = vmatpush1.msra.mxu0 0.0
      %1187 = vmatprep.subr.mxu0 0.0
      %1188 = vmatpush1.msra.mxu0 0.0
      %1189 = vmatprep.subr.mxu0 0.0
      %1190 = vmatpush1.msra.mxu0 0.0
      %1191 = vmatprep.subr.mxu0 0.0
      %1192 = vmatpush1.msra.mxu0 0.0
      %1193 = vmatprep.subr.mxu0 0.0
      %1194 = vmatpush1.msra.mxu0 0.0
      %1195 = vmatprep.subr.mxu0 0.0
      %1196 = vmatpush1.msra.mxu0 0.0
      %1197 = vmatprep.subr.mxu0 0.0
      %1198 = vmatpush1.msra.mxu0 0.0
      %1199 = vmatprep.subr.mxu0 0.0
      %1200 = vmatpush1.msra.mxu0 0.0
      %1201 = vmatprep.subr.mxu0 0.0
      %1202 = vmatpush1.msra.mxu0 0.0
      %1203 = vmatprep.mubr.f32.mxu0 0.0
      %1204 = vmatmul.mubr.f32.gmra.mrb[0].mxu0 %v1134
      %v1205 = vpop.f32.mrb[0].mxu0
      %v1206 = vadd.f32 0.0, %v1205
      %v1207 = vpop.f32.mrb[0].mxu0
      %1208 = vmatprep.mubr.f32.mxu0 0.0
      %1209 = vmatmul.mubr.f32.gmra.mrb[0].mxu0 %v1137
      %v1210 = vpop.f32.mrb[0].mxu0
      %v1211 = vadd.f32 0.0, %v1210
      %v1212 = vpop.f32.mrb[0].mxu0
      %1213 = vdwg.mxu0
      %1216 = vrot.lane.b32.xlu0 %v1206, 40
      %v1217 = vpop.permute.xlu0 %1216
      %1218 = vrot.lane.b32.xlu0 %v1211, 40
      %v1219 = vpop.permute.xlu0 %1218
      %v1222 = vmul.f32 %v485, %v1217
      %v1223 = vmul.f32 %v488, %v1219
      %1226 = vrot.lane.b32.xlu0 %v1222, 88
      %v1227 = vpop.permute.xlu0 %1226
      %1228 = vrot.lane.b32.xlu0 %v1223, 88
      %v1229 = vpop.permute.xlu0 %1228
      %v1232 = vsel %vm606, %v1227, 0.0
      %1233 = vadd.xlane.f32.xlu0 %v1232
      %v1234 = vpop.xlane.xlu0 %1233
      %v1235 = vsel %vm606, %v1229, 0.0
      %1236 = vadd.xlane.f32.xlu0 %v1235
      %v1237 = vpop.xlane.xlu0 %1236
      %v1238 = vadd.f32 %v1113, %v1234
      %v1239 = vadd.f32 %v1114, %v1237
      %1240 = vset.pattern.permute.xlu0 6
      %1241 = vperm.xlu0 %1240, %v507
      %v1242 = vpop.permute.xlu0 %1241
      %1243 = vset.pattern.permute.xlu0 6
      %1244 = vperm.xlu0 %1243, %v508
      %v1245 = vpop.permute.xlu0 %1244
      %vm1246 = vcmp.eq.s32.totalorder %v1242, %v510
      %vm1247 = vcmp.eq.s32.totalorder %v1245, %v510
      %v1248 = vsel %vm1246, 1, 0
      %v1249 = vsel %vm1247, 1, 0
      %v1250 = vcvt.s32.f32 %v1248
      %v1251 = vcvt.s32.f32 %v1249
      %1252 = vrot.lane.b32.xlu0 %v299, 72
      %v1253 = vpop.permute.xlu0 %1252
      %1254 = vrot.lane.b32.xlu0 %v300, 72
      %v1255 = vpop.permute.xlu0 %1254
      %v1259 = vsel %vm305, %v1250, 0
      %v1262 = vsel %vm305, %v1251, 0
      %1264 = vmatprep.subr.mxu0 0.0
      %1265 = vmatpush1.msra.mxu0 %v1253
      %1266 = vmatprep.subr.mxu0 0.0
      %1267 = vmatpush1.msra.mxu0 %v1255
      %1268 = vmatprep.subr.mxu0 0.0
      %1269 = vmatpush1.msra.mxu0 0.0
      %1270 = vmatprep.subr.mxu0 0.0
      %1271 = vmatpush1.msra.mxu0 0.0
      %1272 = vmatprep.subr.mxu0 0.0
      %1273 = vmatpush1.msra.mxu0 0.0
      %1274 = vmatprep.subr.mxu0 0.0
      %1275 = vmatpush1.msra.mxu0 0.0
      %1276 = vmatprep.subr.mxu0 0.0
      %1277 = vmatpush1.msra.mxu0 0.0
      %1278 = vmatprep.subr.mxu0 0.0
      %1279 = vmatpush1.msra.mxu0 0.0
      %1280 = vmatprep.subr.mxu0 0.0
      %1281 = vmatpush1.msra.mxu0 0.0
      %1282 = vmatprep.subr.mxu0 0.0
      %1283 = vmatpush1.msra.mxu0 0.0
      %1284 = vmatprep.subr.mxu0 0.0
      %1285 = vmatpush1.msra.mxu0 0.0
      %1286 = vmatprep.subr.mxu0 0.0
      %1287 = vmatpush1.msra.mxu0 0.0
      %1288 = vmatprep.subr.mxu0 0.0
      %1289 = vmatpush1.msra.mxu0 0.0
      %1290 = vmatprep.subr.mxu0 0.0
      %1291 = vmatpush1.msra.mxu0 0.0
      %1292 = vmatprep.subr.mxu0 0.0
      %1293 = vmatpush1.msra.mxu0 0.0
      %1294 = vmatprep.subr.mxu0 0.0
      %1295 = vmatpush1.msra.mxu0 0.0
      %1296 = vmatprep.subr.mxu0 0.0
      %1297 = vmatpush1.msra.mxu0 0.0
      %1298 = vmatprep.subr.mxu0 0.0
      %1299 = vmatpush1.msra.mxu0 0.0
      %1300 = vmatprep.subr.mxu0 0.0
      %1301 = vmatpush1.msra.mxu0 0.0
      %1302 = vmatprep.subr.mxu0 0.0
      %1303 = vmatpush1.msra.mxu0 0.0
      %1304 = vmatprep.subr.mxu0 0.0
      %1305 = vmatpush1.msra.mxu0 0.0
      %1306 = vmatprep.subr.mxu0 0.0
      %1307 = vmatpush1.msra.mxu0 0.0
      %1308 = vmatprep.subr.mxu0 0.0
      %1309 = vmatpush1.msra.mxu0 0.0
      %1310 = vmatprep.subr.mxu0 0.0
      %1311 = vmatpush1.msra.mxu0 0.0
      %1312 = vmatprep.subr.mxu0 0.0
      %1313 = vmatpush1.msra.mxu0 0.0
      %1314 = vmatprep.subr.mxu0 0.0
      %1315 = vmatpush1.msra.mxu0 0.0
      %1316 = vmatprep.subr.mxu0 0.0
      %1317 = vmatpush1.msra.mxu0 0.0
      %1318 = vmatprep.subr.mxu0 0.0
      %1319 = vmatpush1.msra.mxu0 0.0
      %1320 = vmatprep.subr.mxu0 0.0
      %1321 = vmatpush1.msra.mxu0 0.0
      %1322 = vmatprep.subr.mxu0 0.0
      %1323 = vmatpush1.msra.mxu0 0.0
      %1324 = vmatprep.subr.mxu0 0.0
      %1325 = vmatpush1.msra.mxu0 0.0
      %1326 = vmatprep.subr.mxu0 0.0
      %1327 = vmatpush1.msra.mxu0 0.0
      %1328 = vmatprep.mubr.f32.mxu0 0.0
      %1329 = vmatmul.mubr.f32.gmra.mrb[0].mxu0 %v1259
      %v1330 = vpop.f32.mrb[0].mxu0
      %v1331 = vadd.f32 0.0, %v1330
      %v1332 = vpop.f32.mrb[0].mxu0
      %1333 = vmatprep.mubr.f32.mxu0 0.0
      %1334 = vmatmul.mubr.f32.gmra.mrb[0].mxu0 %v1262
      %v1335 = vpop.f32.mrb[0].mxu0
      %v1336 = vadd.f32 0.0, %v1335
      %v1337 = vpop.f32.mrb[0].mxu0
      %1338 = vdwg.mxu0
      %1341 = vrot.lane.b32.xlu0 %v1331, 48
      %v1342 = vpop.permute.xlu0 %1341
      %1343 = vrot.lane.b32.xlu0 %v1336, 48
      %v1344 = vpop.permute.xlu0 %1343
      %v1347 = vmul.f32 %v485, %v1342
      %v1348 = vmul.f32 %v488, %v1344
      %1351 = vrot.lane.b32.xlu0 %v1347, 80
      %v1352 = vpop.permute.xlu0 %1351
      %1353 = vrot.lane.b32.xlu0 %v1348, 80
      %v1354 = vpop.permute.xlu0 %1353
      %v1357 = vsel %vm606, %v1352, 0.0
      %1358 = vadd.xlane.f32.xlu0 %v1357
      %v1359 = vpop.xlane.xlu0 %1358
      %v1360 = vsel %vm606, %v1354, 0.0
      %1361 = vadd.xlane.f32.xlu0 %v1360
      %v1362 = vpop.xlane.xlu0 %1361
      %v1363 = vadd.f32 %v1238, %v1359
      %v1364 = vadd.f32 %v1239, %v1362
      %1365 = vset.pattern.permute.xlu0 7
      %1366 = vperm.xlu0 %1365, %v507
      %v1367 = vpop.permute.xlu0 %1366
      %1368 = vset.pattern.permute.xlu0 7
      %1369 = vperm.xlu0 %1368, %v508
      %v1370 = vpop.permute.xlu0 %1369
      %vm1371 = vcmp.eq.s32.totalorder %v1367, %v510
      %vm1372 = vcmp.eq.s32.totalorder %v1370, %v510
      %v1373 = vsel %vm1371, 1, 0
      %v1374 = vsel %vm1372, 1, 0
      %v1375 = vcvt.s32.f32 %v1373
      %v1376 = vcvt.s32.f32 %v1374
      %1377 = vrot.lane.b32.xlu0 %v299, 64
      %v1378 = vpop.permute.xlu0 %1377
      %1379 = vrot.lane.b32.xlu0 %v300, 64
      %v1380 = vpop.permute.xlu0 %1379
      %v1384 = vsel %vm305, %v1375, 0
      %v1387 = vsel %vm305, %v1376, 0
      %1389 = vmatprep.subr.mxu0 0.0
      %1390 = vmatpush1.msra.mxu0 %v1378
      %1391 = vmatprep.subr.mxu0 0.0
      %1392 = vmatpush1.msra.mxu0 %v1380
      %1393 = vmatprep.subr.mxu0 0.0
      %1394 = vmatpush1.msra.mxu0 0.0
      %1395 = vmatprep.subr.mxu0 0.0
      %1396 = vmatpush1.msra.mxu0 0.0
      %1397 = vmatprep.subr.mxu0 0.0
      %1398 = vmatpush1.msra.mxu0 0.0
      %1399 = vmatprep.subr.mxu0 0.0
      %1400 = vmatpush1.msra.mxu0 0.0
      %1401 = vmatprep.subr.mxu0 0.0
      %1402 = vmatpush1.msra.mxu0 0.0
      %1403 = vmatprep.subr.mxu0 0.0
      %1404 = vmatpush1.msra.mxu0 0.0
      %1405 = vmatprep.subr.mxu0 0.0
      %1406 = vmatpush1.msra.mxu0 0.0
      %1407 = vmatprep.subr.mxu0 0.0
      %1408 = vmatpush1.msra.mxu0 0.0
      %1409 = vmatprep.subr.mxu0 0.0
      %1410 = vmatpush1.msra.mxu0 0.0
      %1411 = vmatprep.subr.mxu0 0.0
      %1412 = vmatpush1.msra.mxu0 0.0
      %1413 = vmatprep.subr.mxu0 0.0
      %1414 = vmatpush1.msra.mxu0 0.0
      %1415 = vmatprep.subr.mxu0 0.0
      %1416 = vmatpush1.msra.mxu0 0.0
      %1417 = vmatprep.subr.mxu0 0.0
      %1418 = vmatpush1.msra.mxu0 0.0
      %1419 = vmatprep.subr.mxu0 0.0
      %1420 = vmatpush1.msra.mxu0 0.0
      %1421 = vmatprep.subr.mxu0 0.0
      %1422 = vmatpush1.msra.mxu0 0.0
      %1423 = vmatprep.subr.mxu0 0.0
      %1424 = vmatpush1.msra.mxu0 0.0
      %1425 = vmatprep.subr.mxu0 0.0
      %1426 = vmatpush1.msra.mxu0 0.0
      %1427 = vmatprep.subr.mxu0 0.0
      %1428 = vmatpush1.msra.mxu0 0.0
      %1429 = vmatprep.subr.mxu0 0.0
      %1430 = vmatpush1.msra.mxu0 0.0
      %1431 = vmatprep.subr.mxu0 0.0
      %1432 = vmatpush1.msra.mxu0 0.0
      %1433 = vmatprep.subr.mxu0 0.0
      %1434 = vmatpush1.msra.mxu0 0.0
      %1435 = vmatprep.subr.mxu0 0.0
      %1436 = vmatpush1.msra.mxu0 0.0
      %1437 = vmatprep.subr.mxu0 0.0
      %1438 = vmatpush1.msra.mxu0 0.0
      %1439 = vmatprep.subr.mxu0 0.0
      %1440 = vmatpush1.msra.mxu0 0.0
      %1441 = vmatprep.subr.mxu0 0.0
      %1442 = vmatpush1.msra.mxu0 0.0
      %1443 = vmatprep.subr.mxu0 0.0
      %1444 = vmatpush1.msra.mxu0 0.0
      %1445 = vmatprep.subr.mxu0 0.0
      %1446 = vmatpush1.msra.mxu0 0.0
      %1447 = vmatprep.subr.mxu0 0.0
      %1448 = vmatpush1.msra.mxu0 0.0
      %1449 = vmatprep.subr.mxu0 0.0
      %1450 = vmatpush1.msra.mxu0 0.0
      %1451 = vmatprep.subr.mxu0 0.0
      %1452 = vmatpush1.msra.mxu0 0.0
      %1453 = vmatprep.mubr.f32.mxu0 0.0
      %1454 = vmatmul.mubr.f32.gmra.mrb[0].mxu0 %v1384
      %v1455 = vpop.f32.mrb[0].mxu0
      %v1456 = vadd.f32 0.0, %v1455
      %v1457 = vpop.f32.mrb[0].mxu0
      %1458 = vmatprep.mubr.f32.mxu0 0.0
      %1459 = vmatmul.mubr.f32.gmra.mrb[0].mxu0 %v1387
      %v1460 = vpop.f32.mrb[0].mxu0
      %v1461 = vadd.f32 0.0, %v1460
      %v1462 = vpop.f32.mrb[0].mxu0
      %1463 = vdwg.mxu0
      %1466 = vrot.lane.b32.xlu0 %v1456, 56
      %v1467 = vpop.permute.xlu0 %1466
      %1468 = vrot.lane.b32.xlu0 %v1461, 56
      %v1469 = vpop.permute.xlu0 %1468
      %v1472 = vmul.f32 %v485, %v1467
      %v1473 = vmul.f32 %v488, %v1469
      %1476 = vrot.lane.b32.xlu0 %v1472, 72
      %v1477 = vpop.permute.xlu0 %1476
      %1478 = vrot.lane.b32.xlu0 %v1473, 72
      %v1479 = vpop.permute.xlu0 %1478
      %v1482 = vsel %vm606, %v1477, 0.0
      %1483 = vadd.xlane.f32.xlu0 %v1482
      %v1484 = vpop.xlane.xlu0 %1483
      %v1485 = vsel %vm606, %v1479, 0.0
      %1486 = vadd.xlane.f32.xlu0 %v1485
      %v1487 = vpop.xlane.xlu0 %1486
      %v1488 = vadd.f32 %v1363, %v1484
      %v1489 = vadd.f32 %v1364, %v1487
      %1490 = vset.pattern.permute.xlu0 8
      %1491 = vperm.xlu0 %1490, %v507
      %v1492 = vpop.permute.xlu0 %1491
      %1493 = vset.pattern.permute.xlu0 8
      %1494 = vperm.xlu0 %1493, %v508
      %v1495 = vpop.permute.xlu0 %1494
      %vm1496 = vcmp.eq.s32.totalorder %v1492, %v510
      %vm1497 = vcmp.eq.s32.totalorder %v1495, %v510
      %v1498 = vsel %vm1496, 1, 0
      %v1499 = vsel %vm1497, 1, 0
      %v1500 = vcvt.s32.f32 %v1498
      %v1501 = vcvt.s32.f32 %v1499
      %1502 = vrot.lane.b32.xlu0 %v299, 56
      %v1503 = vpop.permute.xlu0 %1502
      %1504 = vrot.lane.b32.xlu0 %v300, 56
      %v1505 = vpop.permute.xlu0 %1504
      %v1509 = vsel %vm305, %v1500, 0
      %v1512 = vsel %vm305, %v1501, 0
      %1514 = vmatprep.subr.mxu0 0.0
      %1515 = vmatpush1.msra.mxu0 %v1503
      %1516 = vmatprep.subr.mxu0 0.0
      %1517 = vmatpush1.msra.mxu0 %v1505
      %1518 = vmatprep.subr.mxu0 0.0
      %1519 = vmatpush1.msra.mxu0 0.0
      %1520 = vmatprep.subr.mxu0 0.0
      %1521 = vmatpush1.msra.mxu0 0.0
      %1522 = vmatprep.subr.mxu0 0.0
      %1523 = vmatpush1.msra.mxu0 0.0
      %1524 = vmatprep.subr.mxu0 0.0
      %1525 = vmatpush1.msra.mxu0 0.0
      %1526 = vmatprep.subr.mxu0 0.0
      %1527 = vmatpush1.msra.mxu0 0.0
      %1528 = vmatprep.subr.mxu0 0.0
      %1529 = vmatpush1.msra.mxu0 0.0
      %1530 = vmatprep.subr.mxu0 0.0
      %1531 = vmatpush1.msra.mxu0 0.0
      %1532 = vmatprep.subr.mxu0 0.0
      %1533 = vmatpush1.msra.mxu0 0.0
      %1534 = vmatprep.subr.mxu0 0.0
      %1535 = vmatpush1.msra.mxu0 0.0
      %1536 = vmatprep.subr.mxu0 0.0
      %1537 = vmatpush1.msra.mxu0 0.0
      %1538 = vmatprep.subr.mxu0 0.0
      %1539 = vmatpush1.msra.mxu0 0.0
      %1540 = vmatprep.subr.mxu0 0.0
      %1541 = vmatpush1.msra.mxu0 0.0
      %1542 = vmatprep.subr.mxu0 0.0
      %1543 = vmatpush1.msra.mxu0 0.0
      %1544 = vmatprep.subr.mxu0 0.0
      %1545 = vmatpush1.msra.mxu0 0.0
      %1546 = vmatprep.subr.mxu0 0.0
      %1547 = vmatpush1.msra.mxu0 0.0
      %1548 = vmatprep.subr.mxu0 0.0
      %1549 = vmatpush1.msra.mxu0 0.0
      %1550 = vmatprep.subr.mxu0 0.0
      %1551 = vmatpush1.msra.mxu0 0.0
      %1552 = vmatprep.subr.mxu0 0.0
      %1553 = vmatpush1.msra.mxu0 0.0
      %1554 = vmatprep.subr.mxu0 0.0
      %1555 = vmatpush1.msra.mxu0 0.0
      %1556 = vmatprep.subr.mxu0 0.0
      %1557 = vmatpush1.msra.mxu0 0.0
      %1558 = vmatprep.subr.mxu0 0.0
      %1559 = vmatpush1.msra.mxu0 0.0
      %1560 = vmatprep.subr.mxu0 0.0
      %1561 = vmatpush1.msra.mxu0 0.0
      %1562 = vmatprep.subr.mxu0 0.0
      %1563 = vmatpush1.msra.mxu0 0.0
      %1564 = vmatprep.subr.mxu0 0.0
      %1565 = vmatpush1.msra.mxu0 0.0
      %1566 = vmatprep.subr.mxu0 0.0
      %1567 = vmatpush1.msra.mxu0 0.0
      %1568 = vmatprep.subr.mxu0 0.0
      %1569 = vmatpush1.msra.mxu0 0.0
      %1570 = vmatprep.subr.mxu0 0.0
      %1571 = vmatpush1.msra.mxu0 0.0
      %1572 = vmatprep.subr.mxu0 0.0
      %1573 = vmatpush1.msra.mxu0 0.0
      %1574 = vmatprep.subr.mxu0 0.0
      %1575 = vmatpush1.msra.mxu0 0.0
      %1576 = vmatprep.subr.mxu0 0.0
      %1577 = vmatpush1.msra.mxu0 0.0
      %1578 = vmatprep.mubr.f32.mxu0 0.0
      %1579 = vmatmul.mubr.f32.gmra.mrb[0].mxu0 %v1509
      %v1580 = vpop.f32.mrb[0].mxu0
      %v1581 = vadd.f32 0.0, %v1580
      %v1582 = vpop.f32.mrb[0].mxu0
      %1583 = vmatprep.mubr.f32.mxu0 0.0
      %1584 = vmatmul.mubr.f32.gmra.mrb[0].mxu0 %v1512
      %v1585 = vpop.f32.mrb[0].mxu0
      %v1586 = vadd.f32 0.0, %v1585
      %v1587 = vpop.f32.mrb[0].mxu0
      %1588 = vdwg.mxu0
      %1591 = vrot.lane.b32.xlu0 %v1581, 64
      %v1592 = vpop.permute.xlu0 %1591
      %1593 = vrot.lane.b32.xlu0 %v1586, 64
      %v1594 = vpop.permute.xlu0 %1593
      %v1597 = vmul.f32 %v485, %v1592
      %v1598 = vmul.f32 %v488, %v1594
      %1601 = vrot.lane.b32.xlu0 %v1597, 64
      %v1602 = vpop.permute.xlu0 %1601
      %1603 = vrot.lane.b32.xlu0 %v1598, 64
      %v1604 = vpop.permute.xlu0 %1603
      %v1607 = vsel %vm606, %v1602, 0.0
      %1608 = vadd.xlane.f32.xlu0 %v1607
      %v1609 = vpop.xlane.xlu0 %1608
      %v1610 = vsel %vm606, %v1604, 0.0
      %1611 = vadd.xlane.f32.xlu0 %v1610
      %v1612 = vpop.xlane.xlu0 %1611
      %v1613 = vadd.f32 %v1488, %v1609
      %v1614 = vadd.f32 %v1489, %v1612
      %1615 = vset.pattern.permute.xlu0 9
      %1616 = vperm.xlu0 %1615, %v507
      %v1617 = vpop.permute.xlu0 %1616
      %1618 = vset.pattern.permute.xlu0 9
      %1619 = vperm.xlu0 %1618, %v508
      %v1620 = vpop.permute.xlu0 %1619
      %vm1621 = vcmp.eq.s32.totalorder %v1617, %v510
      %vm1622 = vcmp.eq.s32.totalorder %v1620, %v510
      %v1623 = vsel %vm1621, 1, 0
      %v1624 = vsel %vm1622, 1, 0
      %v1625 = vcvt.s32.f32 %v1623
      %v1626 = vcvt.s32.f32 %v1624
      %1627 = vrot.lane.b32.xlu0 %v299, 48
      %v1628 = vpop.permute.xlu0 %1627
      %1629 = vrot.lane.b32.xlu0 %v300, 48
      %v1630 = vpop.permute.xlu0 %1629
      %v1634 = vsel %vm305, %v1625, 0
      %v1637 = vsel %vm305, %v1626, 0
      %1639 = vmatprep.subr.mxu0 0.0
      %1640 = vmatpush1.msra.mxu0 %v1628
      %1641 = vmatprep.subr.mxu0 0.0
      %1642 = vmatpush1.msra.mxu0 %v1630
      %1643 = vmatprep.subr.mxu0 0.0
      %1644 = vmatpush1.msra.mxu0 0.0
      %1645 = vmatprep.subr.mxu0 0.0
      %1646 = vmatpush1.msra.mxu0 0.0
      %1647 = vmatprep.subr.mxu0 0.0
      %1648 = vmatpush1.msra.mxu0 0.0
      %1649 = vmatprep.subr.mxu0 0.0
      %1650 = vmatpush1.msra.mxu0 0.0
      %1651 = vmatprep.subr.mxu0 0.0
      %1652 = vmatpush1.msra.mxu0 0.0
      %1653 = vmatprep.subr.mxu0 0.0
      %1654 = vmatpush1.msra.mxu0 0.0
      %1655 = vmatprep.subr.mxu0 0.0
      %1656 = vmatpush1.msra.mxu0 0.0
      %1657 = vmatprep.subr.mxu0 0.0
      %1658 = vmatpush1.msra.mxu0 0.0
      %1659 = vmatprep.subr.mxu0 0.0
      %1660 = vmatpush1.msra.mxu0 0.0
      %1661 = vmatprep.subr.mxu0 0.0
      %1662 = vmatpush1.msra.mxu0 0.0
      %1663 = vmatprep.subr.mxu0 0.0
      %1664 = vmatpush1.msra.mxu0 0.0
      %1665 = vmatprep.subr.mxu0 0.0
      %1666 = vmatpush1.msra.mxu0 0.0
      %1667 = vmatprep.subr.mxu0 0.0
      %1668 = vmatpush1.msra.mxu0 0.0
      %1669 = vmatprep.subr.mxu0 0.0
      %1670 = vmatpush1.msra.mxu0 0.0
      %1671 = vmatprep.subr.mxu0 0.0
      %1672 = vmatpush1.msra.mxu0 0.0
      %1673 = vmatprep.subr.mxu0 0.0
      %1674 = vmatpush1.msra.mxu0 0.0
      %1675 = vmatprep.subr.mxu0 0.0
      %1676 = vmatpush1.msra.mxu0 0.0
      %1677 = vmatprep.subr.mxu0 0.0
      %1678 = vmatpush1.msra.mxu0 0.0
      %1679 = vmatprep.subr.mxu0 0.0
      %1680 = vmatpush1.msra.mxu0 0.0
      %1681 = vmatprep.subr.mxu0 0.0
      %1682 = vmatpush1.msra.mxu0 0.0
      %1683 = vmatprep.subr.mxu0 0.0
      %1684 = vmatpush1.msra.mxu0 0.0
      %1685 = vmatprep.subr.mxu0 0.0
      %1686 = vmatpush1.msra.mxu0 0.0
      %1687 = vmatprep.subr.mxu0 0.0
      %1688 = vmatpush1.msra.mxu0 0.0
      %1689 = vmatprep.subr.mxu0 0.0
      %1690 = vmatpush1.msra.mxu0 0.0
      %1691 = vmatprep.subr.mxu0 0.0
      %1692 = vmatpush1.msra.mxu0 0.0
      %1693 = vmatprep.subr.mxu0 0.0
      %1694 = vmatpush1.msra.mxu0 0.0
      %1695 = vmatprep.subr.mxu0 0.0
      %1696 = vmatpush1.msra.mxu0 0.0
      %1697 = vmatprep.subr.mxu0 0.0
      %1698 = vmatpush1.msra.mxu0 0.0
      %1699 = vmatprep.subr.mxu0 0.0
      %1700 = vmatpush1.msra.mxu0 0.0
      %1701 = vmatprep.subr.mxu0 0.0
      %1702 = vmatpush1.msra.mxu0 0.0
      %1703 = vmatprep.mubr.f32.mxu0 0.0
      %1704 = vmatmul.mubr.f32.gmra.mrb[0].mxu0 %v1634
      %v1705 = vpop.f32.mrb[0].mxu0
      %v1706 = vadd.f32 0.0, %v1705
      %v1707 = vpop.f32.mrb[0].mxu0
      %1708 = vmatprep.mubr.f32.mxu0 0.0
      %1709 = vmatmul.mubr.f32.gmra.mrb[0].mxu0 %v1637
      %v1710 = vpop.f32.mrb[0].mxu0
      %v1711 = vadd.f32 0.0, %v1710
      %v1712 = vpop.f32.mrb[0].mxu0
      %1713 = vdwg.mxu0
      %1716 = vrot.lane.b32.xlu0 %v1706, 72
      %v1717 = vpop.permute.xlu0 %1716
      %1718 = vrot.lane.b32.xlu0 %v1711, 72
      %v1719 = vpop.permute.xlu0 %1718
      %v1722 = vmul.f32 %v485, %v1717
      %v1723 = vmul.f32 %v488, %v1719
      %1726 = vrot.lane.b32.xlu0 %v1722, 56
      %v1727 = vpop.permute.xlu0 %1726
      %1728 = vrot.lane.b32.xlu0 %v1723, 56
      %v1729 = vpop.permute.xlu0 %1728
      %v1732 = vsel %vm606, %v1727, 0.0
      %1733 = vadd.xlane.f32.xlu0 %v1732
      %v1734 = vpop.xlane.xlu0 %1733
      %v1735 = vsel %vm606, %v1729, 0.0
      %1736 = vadd.xlane.f32.xlu0 %v1735
      %v1737 = vpop.xlane.xlu0 %1736
      %v1738 = vadd.f32 %v1613, %v1734
      %v1739 = vadd.f32 %v1614, %v1737
      %1740 = vset.pattern.permute.xlu0 10
      %1741 = vperm.xlu0 %1740, %v507
      %v1742 = vpop.permute.xlu0 %1741
      %1743 = vset.pattern.permute.xlu0 10
      %1744 = vperm.xlu0 %1743, %v508
      %v1745 = vpop.permute.xlu0 %1744
      %vm1746 = vcmp.eq.s32.totalorder %v1742, %v510
      %vm1747 = vcmp.eq.s32.totalorder %v1745, %v510
      %v1748 = vsel %vm1746, 1, 0
      %v1749 = vsel %vm1747, 1, 0
      %v1750 = vcvt.s32.f32 %v1748
      %v1751 = vcvt.s32.f32 %v1749
      %1752 = vrot.lane.b32.xlu0 %v299, 40
      %v1753 = vpop.permute.xlu0 %1752
      %1754 = vrot.lane.b32.xlu0 %v300, 40
      %v1755 = vpop.permute.xlu0 %1754
      %v1759 = vsel %vm305, %v1750, 0
      %v1762 = vsel %vm305, %v1751, 0
      %1764 = vmatprep.subr.mxu0 0.0
      %1765 = vmatpush1.msra.mxu0 %v1753
      %1766 = vmatprep.subr.mxu0 0.0
      %1767 = vmatpush1.msra.mxu0 %v1755
      %1768 = vmatprep.subr.mxu0 0.0
      %1769 = vmatpush1.msra.mxu0 0.0
      %1770 = vmatprep.subr.mxu0 0.0
      %1771 = vmatpush1.msra.mxu0 0.0
      %1772 = vmatprep.subr.mxu0 0.0
      %1773 = vmatpush1.msra.mxu0 0.0
      %1774 = vmatprep.subr.mxu0 0.0
      %1775 = vmatpush1.msra.mxu0 0.0
      %1776 = vmatprep.subr.mxu0 0.0
      %1777 = vmatpush1.msra.mxu0 0.0
      %1778 = vmatprep.subr.mxu0 0.0
      %1779 = vmatpush1.msra.mxu0 0.0
      %1780 = vmatprep.subr.mxu0 0.0
      %1781 = vmatpush1.msra.mxu0 0.0
      %1782 = vmatprep.subr.mxu0 0.0
      %1783 = vmatpush1.msra.mxu0 0.0
      %1784 = vmatprep.subr.mxu0 0.0
      %1785 = vmatpush1.msra.mxu0 0.0
      %1786 = vmatprep.subr.mxu0 0.0
      %1787 = vmatpush1.msra.mxu0 0.0
      %1788 = vmatprep.subr.mxu0 0.0
      %1789 = vmatpush1.msra.mxu0 0.0
      %1790 = vmatprep.subr.mxu0 0.0
      %1791 = vmatpush1.msra.mxu0 0.0
      %1792 = vmatprep.subr.mxu0 0.0
      %1793 = vmatpush1.msra.mxu0 0.0
      %1794 = vmatprep.subr.mxu0 0.0
      %1795 = vmatpush1.msra.mxu0 0.0
      %1796 = vmatprep.subr.mxu0 0.0
      %1797 = vmatpush1.msra.mxu0 0.0
      %1798 = vmatprep.subr.mxu0 0.0
      %1799 = vmatpush1.msra.mxu0 0.0
      %1800 = vmatprep.subr.mxu0 0.0
      %1801 = vmatpush1.msra.mxu0 0.0
      %1802 = vmatprep.subr.mxu0 0.0
      %1803 = vmatpush1.msra.mxu0 0.0
      %1804 = vmatprep.subr.mxu0 0.0
      %1805 = vmatpush1.msra.mxu0 0.0
      %1806 = vmatprep.subr.mxu0 0.0
      %1807 = vmatpush1.msra.mxu0 0.0
      %1808 = vmatprep.subr.mxu0 0.0
      %1809 = vmatpush1.msra.mxu0 0.0
      %1810 = vmatprep.subr.mxu0 0.0
      %1811 = vmatpush1.msra.mxu0 0.0
      %1812 = vmatprep.subr.mxu0 0.0
      %1813 = vmatpush1.msra.mxu0 0.0
      %1814 = vmatprep.subr.mxu0 0.0
      %1815 = vmatpush1.msra.mxu0 0.0
      %1816 = vmatprep.subr.mxu0 0.0
      %1817 = vmatpush1.msra.mxu0 0.0
      %1818 = vmatprep.subr.mxu0 0.0
      %1819 = vmatpush1.msra.mxu0 0.0
      %1820 = vmatprep.subr.mxu0 0.0
      %1821 = vmatpush1.msra.mxu0 0.0
      %1822 = vmatprep.subr.mxu0 0.0
      %1823 = vmatpush1.msra.mxu0 0.0
      %1824 = vmatprep.subr.mxu0 0.0
      %1825 = vmatpush1.msra.mxu0 0.0
      %1826 = vmatprep.subr.mxu0 0.0
      %1827 = vmatpush1.msra.mxu0 0.0
      %1828 = vmatprep.mubr.f32.mxu0 0.0
      %1829 = vmatmul.mubr.f32.gmra.mrb[0].mxu0 %v1759
      %v1830 = vpop.f32.mrb[0].mxu0
      %v1831 = vadd.f32 0.0, %v1830
      %v1832 = vpop.f32.mrb[0].mxu0
      %1833 = vmatprep.mubr.f32.mxu0 0.0
      %1834 = vmatmul.mubr.f32.gmra.mrb[0].mxu0 %v1762
      %v1835 = vpop.f32.mrb[0].mxu0
      %v1836 = vadd.f32 0.0, %v1835
      %v1837 = vpop.f32.mrb[0].mxu0
      %1838 = vdwg.mxu0
      %1841 = vrot.lane.b32.xlu0 %v1831, 80
      %v1842 = vpop.permute.xlu0 %1841
      %1843 = vrot.lane.b32.xlu0 %v1836, 80
      %v1844 = vpop.permute.xlu0 %1843
      %v1847 = vmul.f32 %v485, %v1842
      %v1848 = vmul.f32 %v488, %v1844
      %1851 = vrot.lane.b32.xlu0 %v1847, 48
      %v1852 = vpop.permute.xlu0 %1851
      %1853 = vrot.lane.b32.xlu0 %v1848, 48
      %v1854 = vpop.permute.xlu0 %1853
      %v1857 = vsel %vm606, %v1852, 0.0
      %1858 = vadd.xlane.f32.xlu0 %v1857
      %v1859 = vpop.xlane.xlu0 %1858
      %v1860 = vsel %vm606, %v1854, 0.0
      %1861 = vadd.xlane.f32.xlu0 %v1860
      %v1862 = vpop.xlane.xlu0 %1861
      %v1863 = vadd.f32 %v1738, %v1859
      %v1864 = vadd.f32 %v1739, %v1862
      %s1865 = sld [smem:[#allocation2]]
      %vm1866 = vcmask 7168
      %v1867 = vsel %vm1866, %v503, %v1863
      %v1868 = vsel %vm1866, %v506, %v1864
      %v1869 = vmul.f32 %v1867, 0.09090909
      %v1870 = vmul.f32 %v1868, 0.09090909
      %v1871 = vstv %s1865
      %v1872 = vadd.f32 %v1869, %v1871
      %v1873 = vadd.f32 %v1870, %v1871
      %1874 = vxpose.xlu0.b32.start [1/16] %v1872, 128
      %1875 = vxpose.xlu0.b32.cont [2/16] %v1873, 128
      %1876 = vxpose.xlu0.b32.cont [3/16] 0.0, 128
      %1877 = vxpose.xlu0.b32.cont [4/16] 0.0, 128
      %1878 = vxpose.xlu0.b32.cont [5/16] 0.0, 128
      %1879 = vxpose.xlu0.b32.cont [6/16] 0.0, 128
      %1880 = vxpose.xlu0.b32.cont [7/16] 0.0, 128
      %1881 = vxpose.xlu0.b32.cont [8/16] 0.0, 128
      %1882 = vxpose.xlu0.b32.cont [9/16] 0.0, 128
      %1883 = vxpose.xlu0.b32.cont [10/16] 0.0, 128
      %1884 = vxpose.xlu0.b32.cont [11/16] 0.0, 128
      %1885 = vxpose.xlu0.b32.cont [12/16] 0.0, 128
      %1886 = vxpose.xlu0.b32.cont [13/16] 0.0, 128
      %1887 = vxpose.xlu0.b32.cont [14/16] 0.0, 128
      %1888 = vxpose.xlu0.b32.cont [15/16] 0.0, 128
      %1889 = vxpose.xlu0.b32.end [16/16] 0.0, 128
      %v1890 = vpop.trf.xlu0
      %v1891 = vpop.trf.xlu0
      %v1892 = vpop.trf.xlu0
      %v1893 = vpop.trf.xlu0
      %v1894 = vpop.trf.xlu0
      %v1895 = vpop.trf.xlu0
      %v1896 = vpop.trf.xlu0
      %v1897 = vpop.trf.xlu0
      %v1898 = vpop.trf.xlu0
      %v1899 = vpop.trf.xlu0
      %v1900 = vpop.trf.xlu0
      %v1901 = vpop.trf.xlu0
      %v1902 = vpop.trf.xlu0
      %v1903 = vpop.trf.xlu0
      %v1904 = vpop.trf.xlu0
      %v1905 = vpop.trf.xlu0
      %vm1906 = vcmask 123904
      %1907 = vst.msk [vmem:[%s297] sm:$0x3] %vm1906, %v1890
      %p1908 = scmp.lt.s32.totalorder %s19, 1
      %s1909 = scalar_select %p1908, %s19, 1
      %s1910 = smul.addr %s1909, 2
      %s1911 = scalar_lea.vmem %s7, %s1910
      // Predicated region
      $region49: #{stdgi_forward.1} parent=47 // pred_check
        %p1912 = pneg %p194
      $region50: #{stdgi_forward.1} parent=47 // pred_check_branch
        %1914 = sbr.rel (%p1912) target = $region52
      $region51: #{stdgi_forward.1} parent=47 // pred_region
        _
      $region52: #{stdgi_forward.1} parent=47 // pred_fallthru
        _
    $region48: #{stdgi_forward.1} parent=5 // pred_fallthru
      _
    %p1915 = scmp.le.s32.totalorder 2, %s14
    // Predicated region
    $region53: #{stdgi_forward.1} parent=5 // pred_check
      %p1916 = pneg %p1915
    $region54: #{stdgi_forward.1} parent=5 // pred_check_branch
      %1918 = sbr.rel (%p1916) target = $region56
    $region55: #{stdgi_forward.1} parent=5 // pred_region
      %s1919 = ssub.s32 %s14, 2
      // Predicated region
      $region57: #{stdgi_forward.1} parent=55 // pred_check
        %p1920 = pneg %p200
      $region58: #{stdgi_forward.1} parent=55 // pred_check_branch
        %1922 = sbr.rel (%p1920) target = $region60
      $region59: #{stdgi_forward.1} parent=55 // pred_region
        %p1923 = scmp.lt.s32.totalorder %s20, 1
        %s1924 = scalar_select %p1923, %s20, 1
        %s1925 = smul.addr %s1924, 2
        %s1926 = scalar_lea.vmem %s7, %s1925
      $region60: #{stdgi_forward.1} parent=55 // pred_fallthru
        _
    $region56: #{stdgi_forward.1} parent=5 // pred_fallthru
      _
  $region6: #{stdgi_forward.1} parent=0 // loop_footer
    %s18 = sadd.s32 1, %s14
  $region7: #{stdgi_forward.1} parent=0 // loop_footer_branch
    %13 = sbr.rel target = $region3
  $region8: #{stdgi_forward.1} parent=0 // loop_exit
    _

</llo_original>
